<compile_context>
chip_gen: v5e
topology: v5e:2x2
jax: 0.10.0
libtpu: 0.0.40
codegen_flags: <defaults>
</compile_context>

<pallas_src>
import functools
import math

import jax
import jax.numpy as jnp
from jax import lax
from jax.experimental import pallas as pl
from jax.experimental.pallas import tpu as pltpu


def _silu(v):
    return v * jax.nn.sigmoid(v)


def _softplus(v):
    # matches torch.nn.functional.softplus (threshold=20)
    return jnp.where(v > 20.0, v, jnp.log1p(jnp.exp(v)))


def vim_mamba_kernel(x_ref, mod_ref, ln_g_ref, ln_b_ref, in_w_ref, conv_w_ref,
                     conv_b_ref, fused_w_ref, dt_b_ref, a_ref, dparam_ref,
                     out_w_ref, o_ref,
                     dt_sc, u_sc, b3_sc, c3_sc, y_sc, zg_sc, skip_sc,
                     *, chunk, di_blk, n_pad):
    S, D = x_ref.shape[1], x_ref.shape[2]
    di = in_w_ref.shape[1] // 2          # d_inner = expand * D
    N = a_ref.shape[0]                   # d_state
    K = conv_w_ref.shape[0]              # d_conv
    n_chunks = S // chunk
    n_blocks = di // di_blk

    x = x_ref[0].astype(jnp.float32)                     # (S, D)
    mod = mod_ref[0].astype(jnp.float32)                 # (1, 3D) precomputed adaLN
    shift = mod[:, 0:D]
    scale = mod[:, D:2 * D]
    gate = mod[:, 2 * D:3 * D]

    # ---- LayerNorm(D) + adaLN modulate (f32 elementwise) ----
    mu = jnp.mean(x, axis=-1, keepdims=True)
    var = jnp.mean((x - mu) ** 2, axis=-1, keepdims=True)
    xn = (x - mu) * lax.rsqrt(var + 1e-5)
    xn = xn * ln_g_ref[...] + ln_b_ref[...]
    xm = xn * (1.0 + scale) + shift                      # (S, D)

    # ---- in_proj (bf16 operands, f32 accumulate on the MXU) ----
    xz = jnp.dot(xm.astype(in_w_ref.dtype), in_w_ref[...],
                 preferred_element_type=jnp.float32)     # (S, 2*di)
    x_in = xz[:, :di]
    # gate half staged in bf16 scratch (only consumed after the scan)
    zg_sc[...] = _silu(xz[:, di:]).astype(zg_sc.dtype)

    # ---- causal depthwise conv1d via XLU rolls + iota row mask ----
    conv_w = conv_w_ref[...]                             # (K, di)
    row = lax.broadcasted_iota(jnp.int32, (S, 1), 0)
    acc = jnp.zeros((S, di), jnp.float32) + conv_b_ref[...]
    for j in range(K):                                   # j = causal lookback
        if j == 0:
            xr = x_in
        else:
            xr = jnp.where(row >= j, pltpu.roll(x_in, shift=j, axis=0), 0.0)
        acc = acc + conv_w[K - 1 - j:K - j, :] * xr
    xc = _silu(acc)                                      # (S, di)
    skip_sc[...] = (xc * dparam_ref[...]).astype(skip_sc.dtype)

    # ---- fused x_proj + dt_proj: one MXU matmul, lane-aligned output ----
    # columns: [0:di] dt_lin | [di:di+n_pad] B (first N cols) | [di+n_pad:] C
    dbc = jnp.dot(xc.astype(fused_w_ref.dtype), fused_w_ref[...],
                  preferred_element_type=jnp.float32)    # (S, di + 2*n_pad)
    dt = _softplus(dbc[:, :di] + dt_b_ref[...])          # (S, di)
    dt_sc[...] = dt
    u_sc[...] = dt * xc

    # B, C staged once per batch step: chunk-major and pre-transposed (N, chunk)
    # so the hot loop only takes static column slices (no per-chunk transposes).
    b_slab = dbc[:, di:di + N]                           # (S, N)
    c_slab = dbc[:, di + n_pad:di + n_pad + N]           # (S, N)
    for ci in range(n_chunks):
        r0 = ci * chunk
        b3_sc[ci] = jnp.transpose(b_slab[r0:r0 + chunk, :])
        c3_sc[ci] = jnp.transpose(c_slab[r0:r0 + chunk, :])

    A = a_ref[...]                                       # (N, di) = -exp(A_log)

    # ---- selective scan: static loop over d_inner blocks, fori over chunks ----
    for blk in range(n_blocks):
        c0 = blk * di_blk
        A_blk = A[:, c0:c0 + di_blk]                     # (N, di_blk)

        def chunk_body(ci, h, c0=c0, A_blk=A_blk):
            t0 = pl.multiple_of(ci * chunk, chunk)
            dt_c = dt_sc[pl.ds(t0, chunk), pl.ds(c0, di_blk)]   # (chunk, di_blk)
            u_c = u_sc[pl.ds(t0, chunk), pl.ds(c0, di_blk)]     # (chunk, di_blk)
            b_c = b3_sc[ci]                                     # (N, chunk)
            c_c = c3_sc[ci]                                     # (N, chunk)
            # batch the EUP exps and the B*u products off the recurrence chain
            dA = [jnp.exp(dt_c[t:t + 1, :] * A_blk) for t in range(chunk)]
            dBu = [b_c[:, t:t + 1] * u_c[t:t + 1, :] for t in range(chunk)]
            rows = []
            for t in range(chunk):                              # serial recurrence
                h = dA[t] * h + dBu[t]                          # (N, di_blk)
                rows.append(jnp.sum(h * c_c[:, t:t + 1], axis=0, keepdims=True))
            y_sc[pl.ds(t0, chunk), pl.ds(c0, di_blk)] = jnp.concatenate(rows, axis=0)
            return h

        lax.fori_loop(0, n_chunks, chunk_body,
                      jnp.zeros((N, di_blk), jnp.float32))

    # ---- D-skip, SiLU(z) gate, out_proj, gated residual ----
    y = (y_sc[...] + skip_sc[...].astype(jnp.float32)) * zg_sc[...].astype(jnp.float32)
    x_ssm = jnp.dot(y.astype(out_w_ref.dtype), out_w_ref[...],
                    preferred_element_type=jnp.float32)  # (S, D)
    o_ref[0] = (x_ref[0].astype(jnp.float32) + gate * x_ssm).astype(o_ref.dtype)


def vim_mamba_block(x, c, w, params):
    """Pallas forward. `w` is accepted for interface parity (unused, as in PyTorch)."""
    del w
    B, S, D = x.shape
    p = params
    di = p['in_w'].shape[1] // 2
    R = p['dt_w'].shape[0]
    N = p['alog_t'].shape[0]

    CHUNK = 8
    S_pad = ((S + 15) // 16) * 16            # multiple of 16 (and of CHUNK)
    n_chunks = S_pad // CHUNK
    DI_BLK = 128 if di % 128 == 0 else di    # spill-free scan block over d_inner
    NP = ((N + 127) // 128) * 128            # lane-aligned B/C column groups

    # adaLN modulation hoisted out of the kernel (1-row matmul is a bad MXU fit).
    mod = _silu(c.astype(jnp.float32)) @ p['ada_w'] + p['ada_b']   # (B, 3D)
    mod = mod.reshape(B, 1, 3 * D)

    # Fuse dt_proj into x_proj, with zero-padded lane-aligned B / C regions.
    # TODO(synk): keep the dt columns in f32 (separate small matmul) if bf16
    # composition of the low-rank dt path drifts at production D.
    w_dt = p['xproj_w'][:, :R] @ p['dt_w']                          # (di, di)
    w_B = jnp.zeros((di, NP), jnp.float32).at[:, :N].set(p['xproj_w'][:, R:R + N])
    w_C = jnp.zeros((di, NP), jnp.float32).at[:, :N].set(p['xproj_w'][:, R + N:R + 2 * N])
    w_fused = jnp.concatenate([w_dt, w_B, w_C], axis=1)             # (di, di+2*NP)

    A = -jnp.exp(p['alog_t'])                # precomputed: saves per-step EUP exp

    mm_dtype = jnp.bfloat16                  # MXU operands only; elementwise stays f32
    weights = [p['ln_g'], p['ln_b'],
               p['in_w'].astype(mm_dtype),
               p['conv_w'], p['conv_b'],
               w_fused.astype(mm_dtype),
               p['dt_b'], A, p['dparam'],
               p['out_w'].astype(mm_dtype)]

    x_p = x if S_pad == S else jnp.pad(x, ((0, 0), (0, S_pad - S), (0, 0)))

    kernel = functools.partial(vim_mamba_kernel, chunk=CHUNK, di_blk=DI_BLK, n_pad=NP)

    def weight_spec(a):
        nd = a.ndim
        # constant block index across the batch grid -> single buffer (halves VMEM)
        return pl.BlockSpec(a.shape, lambda b, _nd=nd: (0,) * _nd,
                            pipeline_mode=pl.Buffered(1))

    in_specs = [pl.BlockSpec((1, S_pad, D), lambda b: (b, 0, 0)),
                pl.BlockSpec((1, 1, 3 * D), lambda b: (b, 0, 0))]
    in_specs += [weight_spec(a) for a in weights]
    out_spec = pl.BlockSpec((1, S_pad, D), lambda b: (b, 0, 0))

    scratch = [pltpu.VMEM((S_pad, di), jnp.float32),           # dt
               pltpu.VMEM((S_pad, di), jnp.float32),           # u = dt * conv_out
               pltpu.VMEM((n_chunks, N, CHUNK), jnp.float32),  # B, chunked + transposed
               pltpu.VMEM((n_chunks, N, CHUNK), jnp.float32),  # C, chunked + transposed
               pltpu.VMEM((S_pad, di), jnp.float32),           # scan output
               pltpu.VMEM((S_pad, di), jnp.bfloat16),          # silu(z) gate
               pltpu.VMEM((S_pad, di), jnp.bfloat16)]          # conv_out * D skip

    # per-generation VMEM budget: <=56 MiB on a 64 MiB (v7x) part, more on 128 MiB
    try:
        vmem_cap = int(pltpu.get_tpu_info().vmem_capacity_bytes)
    except Exception:
        vmem_cap = 64 * 1024 * 1024
    vmem_limit = int(min(vmem_cap - 8 * 1024 * 1024, 112 * 1024 * 1024))

    out = pl.pallas_call(
        kernel,
        out_shape=jax.ShapeDtypeStruct((B, S_pad, D), x.dtype),
        grid_spec=pltpu.PrefetchScalarGridSpec(
            num_scalar_prefetch=0,
            grid=(B,),
            in_specs=in_specs,
            out_specs=out_spec,
            scratch_shapes=scratch),
        compiler_params=pltpu.CompilerParams(
            dimension_semantics=("parallel",),
            vmem_limit_bytes=vmem_limit),
    )(x_p, mod, *weights)
    return out[:, :S, :] if S_pad != S else out


def init_params(key, D, d_state, dt_rank, d_conv=4, expand=2):
    di = expand * D
    ks = jax.random.split(key, 8)

    def xavier(k, shape):
        lim = math.sqrt(6.0 / (shape[0] + shape[1]))
        return jax.random.uniform(k, shape, jnp.float32, -lim, lim)

    alog_t = jnp.log(jnp.broadcast_to(
        jnp.arange(1, d_state + 1, dtype=jnp.float32)[:, None], (d_state, di)))

    return dict(
        ada_w=xavier(ks[0], (2 * D, 3 * D)),
        ada_b=jnp.zeros((1, 3 * D), jnp.float32),        # init constant 0 (per module)
        ln_g=jnp.ones((1, D), jnp.float32),
        ln_b=jnp.zeros((1, D), jnp.float32),
        in_w=xavier(ks[1], (D, 2 * di)),
        conv_w=jax.random.uniform(ks[2], (d_conv, di), jnp.float32, -0.5, 0.5),
        conv_b=jax.random.uniform(ks[3], (1, di), jnp.float32, -0.5, 0.5),
        xproj_w=xavier(ks[4], (di, dt_rank + 2 * d_state)),
        dt_w=xavier(ks[5], (dt_rank, di)),
        dt_b=jnp.full((1, di), math.log(math.expm1(0.01)), jnp.float32),
        alog_t=alog_t,                                   # A_log stored transposed (N, di)
        dparam=jnp.ones((1, di), jnp.float32),
        out_w=xavier(ks[6], (di, D)),
    )


def ref_forward(x, c, p, mm_dtype=jnp.bfloat16):
    """Pure-JAX reference (un-fused dt_proj, pad-based conv, per-step scan).

    Mirrors the kernel's precision policy (bf16 matmul operands with f32
    accumulation, bf16 staging of the gate / D-skip) so the comparison
    isolates structural correctness."""
    B, S, D = x.shape
    di = p['in_w'].shape[1] // 2
    R = p['dt_w'].shape[0]
    N = p['alog_t'].shape[0]
    Kc = p['conv_w'].shape[0]

    def mm(a, b):
        return jnp.dot(a.astype(mm_dtype), b.astype(mm_dtype),
                       preferred_element_type=jnp.float32)

    ada = _silu(c) @ p['ada_w'] + p['ada_b']
    shift, scale, gate = ada[:, :D], ada[:, D:2 * D], ada[:, 2 * D:]

    mu = x.mean(-1, keepdims=True)
    var = ((x - mu) ** 2).mean(-1, keepdims=True)
    xn = (x - mu) / jnp.sqrt(var + 1e-5) * p['ln_g'][0] + p['ln_b'][0]
    xm = xn * (1 + scale[:, None, :]) + shift[:, None, :]

    xz = mm(xm, p['in_w'])
    x_in, z = xz[..., :di], xz[..., di:]

    xp = jnp.pad(x_in, ((0, 0), (Kc - 1, 0), (0, 0)))
    conv = p['conv_b'][0] + sum(p['conv_w'][k] * xp[:, k:k + S, :] for k in range(Kc))
    xc = _silu(conv)

    dbc = mm(xc, p['xproj_w'])
    dt = _softplus(mm(dbc[..., :R], p['dt_w']) + p['dt_b'][0])
    Bs, Cs = dbc[..., R:R + N], dbc[..., R + N:R + 2 * N]
    A = -jnp.exp(p['alog_t'])                            # (N, di)

    h = jnp.zeros((B, N, di), jnp.float32)
    ys = []
    for t in range(S):
        dA = jnp.exp(dt[:, t, None, :] * A[None])        # (B, N, di)
        dBx = Bs[:, t, :, None] * (dt[:, t, :] * xc[:, t, :])[:, None, :]
        h = dA * h + dBx
        ys.append(jnp.einsum('bn,bnd->bd', Cs[:, t, :], h))
    ys = jnp.stack(ys, axis=1)                           # (B, S, di)

    zg = _silu(z).astype(jnp.bfloat16).astype(jnp.float32)
    skip = (xc * p['dparam'][0]).astype(jnp.bfloat16).astype(jnp.float32)
    y = (ys + skip) * zg
    x_ssm = mm(y, p['out_w'])
    return x + gate[:, None, :] * x_ssm


if __name__ == "__main__":
    import numpy as np

    # small shapes consistent with the module (S=8 exercises the pad-to-16 path)
    B, S, D = 2, 8, 32
    d_state, d_conv, expand = 16, 4, 2
    dt_rank = max(1, D // 16)            # 2
    dim_inner = expand * D               # 64 (E_dim / dim_inner)

    key = jax.random.PRNGKey(0)
    kx, kc, kw, kp = jax.random.split(key, 4)
    x = jax.random.normal(kx, (B, S, D), jnp.float32)
    c = jax.random.normal(kc, (B, 2 * D), jnp.float32)
    w = jax.random.normal(kw, (B, S, D), jnp.float32)    # unused in forward (as in PyTorch)

    params = init_params(kp, D, d_state, dt_rank, d_conv, expand)

    out = vim_mamba_block(x, c, w, params)
    out = jax.block_until_ready(out)

    ref = ref_forward(x, c, params)
    assert out.shape == (B, S, D)
    assert bool(jnp.all(jnp.isfinite(out)))
    np.testing.assert_allclose(np.asarray(out), np.asarray(ref), rtol=3e-2, atol=3e-2)

    print("KERNEL_OK")
</pallas_src>

<mosaic_0001>
module attributes {stable_mosaic.version = 11 : i64} {
  func.func @vim_mamba_kernel(%arg0: i32, %arg1: memref<1x16x32xf32, #tpu.memory_space<vmem>>, %arg2: memref<1x1x96xf32, #tpu.memory_space<vmem>>, %arg3: memref<1x32xf32, #tpu.memory_space<vmem>>, %arg4: memref<1x32xf32, #tpu.memory_space<vmem>>, %arg5: memref<32x128xbf16, #tpu.memory_space<vmem>>, %arg6: memref<4x64xf32, #tpu.memory_space<vmem>>, %arg7: memref<1x64xf32, #tpu.memory_space<vmem>>, %arg8: memref<64x320xbf16, #tpu.memory_space<vmem>>, %arg9: memref<1x64xf32, #tpu.memory_space<vmem>>, %arg10: memref<16x64xf32, #tpu.memory_space<vmem>>, %arg11: memref<1x64xf32, #tpu.memory_space<vmem>>, %arg12: memref<64x32xbf16, #tpu.memory_space<vmem>>, %arg13: memref<1x16x32xf32, #tpu.memory_space<vmem>>, %arg14: memref<16x64xf32, #tpu.memory_space<vmem>>, %arg15: memref<16x64xf32, #tpu.memory_space<vmem>>, %arg16: memref<2x16x8xf32, #tpu.memory_space<vmem>>, %arg17: memref<2x16x8xf32, #tpu.memory_space<vmem>>, %arg18: memref<16x64xf32, #tpu.memory_space<vmem>>, %arg19: memref<16x64xbf16, #tpu.memory_space<vmem>>, %arg20: memref<16x64xbf16, #tpu.memory_space<vmem>>) attributes {dimension_semantics = [#tpu.dimension_semantics<parallel>], iteration_bounds = array<i64: 2>, scalar_prefetch = 0 : i64, scratch_operands = 7 : i64, tpu.core_type = #tpu.core_type<tc>, window_params = [{transform_indices = @transform_0, window_bounds = array<i64: 1, 16, 32>}, {transform_indices = @transform_1, window_bounds = array<i64: 1, 1, 96>}, {pipeline_mode = #tpu.pipeline_mode<synchronous>, transform_indices = @transform_2, window_bounds = array<i64: 1, 32>}, {pipeline_mode = #tpu.pipeline_mode<synchronous>, transform_indices = @transform_3, window_bounds = array<i64: 1, 32>}, {pipeline_mode = #tpu.pipeline_mode<synchronous>, transform_indices = @transform_4, window_bounds = array<i64: 32, 128>}, {pipeline_mode = #tpu.pipeline_mode<synchronous>, transform_indices = @transform_5, window_bounds = array<i64: 4, 64>}, {pipeline_mode = #tpu.pipeline_mode<synchronous>, transform_indices = @transform_6, window_bounds = array<i64: 1, 64>}, {pipeline_mode = #tpu.pipeline_mode<synchronous>, transform_indices = @transform_7, window_bounds = array<i64: 64, 320>}, {pipeline_mode = #tpu.pipeline_mode<synchronous>, transform_indices = @transform_8, window_bounds = array<i64: 1, 64>}, {pipeline_mode = #tpu.pipeline_mode<synchronous>, transform_indices = @transform_9, window_bounds = array<i64: 16, 64>}, {pipeline_mode = #tpu.pipeline_mode<synchronous>, transform_indices = @transform_10, window_bounds = array<i64: 1, 64>}, {pipeline_mode = #tpu.pipeline_mode<synchronous>, transform_indices = @transform_11, window_bounds = array<i64: 64, 32>}, {transform_indices = @transform_12, window_bounds = array<i64: 1, 16, 32>}]} {
    %c0 = arith.constant 0 : index
    %c0_0 = arith.constant 0 : index
    %c0_1 = arith.constant 0 : index
    %0 = vector.load %arg1[%c0, %c0_0, %c0_1] : memref<1x16x32xf32, #tpu.memory_space<vmem>>, vector<1x16x32xf32>
    %1 = vector.shape_cast %0 : vector<1x16x32xf32> to vector<16x32xf32>
    %c0_2 = arith.constant 0 : index
    %c0_3 = arith.constant 0 : index
    %c0_4 = arith.constant 0 : index
    %2 = vector.load %arg2[%c0_2, %c0_3, %c0_4] : memref<1x1x96xf32, #tpu.memory_space<vmem>>, vector<1x1x96xf32>
    %3 = vector.shape_cast %2 : vector<1x1x96xf32> to vector<1x96xf32>
    %4 = vector.extract_strided_slice %3 {offsets = [0, 0], sizes = [1, 32], strides = [1, 1]} : vector<1x96xf32> to vector<1x32xf32>
    %5 = vector.extract_strided_slice %3 {offsets = [0, 32], sizes = [1, 32], strides = [1, 1]} : vector<1x96xf32> to vector<1x32xf32>
    %6 = vector.extract_strided_slice %3 {offsets = [0, 64], sizes = [1, 32], strides = [1, 1]} : vector<1x96xf32> to vector<1x32xf32>
    %cst = arith.constant dense<0.000000e+00> : vector<16xf32>
    %7 = vector.multi_reduction <add>, %1, %cst [1] : vector<16x32xf32> to vector<16xf32>
    %8 = vector.shape_cast %7 : vector<16xf32> to vector<16x1xf32>
    %cst_5 = arith.constant 3.200000e+01 : f32
    %9 = vector.broadcast %cst_5 : f32 to vector<16x1xf32>
    %10 = arith.divf %8, %9 : vector<16x1xf32>
    %11 = vector.broadcast %10 : vector<16x1xf32> to vector<16x32xf32>
    %12 = arith.subf %1, %11 : vector<16x32xf32>
    %13 = arith.mulf %12, %12 : vector<16x32xf32>
    %cst_6 = arith.constant dense<0.000000e+00> : vector<16xf32>
    %14 = vector.multi_reduction <add>, %13, %cst_6 [1] : vector<16x32xf32> to vector<16xf32>
    %15 = vector.shape_cast %14 : vector<16xf32> to vector<16x1xf32>
    %cst_7 = arith.constant 3.200000e+01 : f32
    %16 = vector.broadcast %cst_7 : f32 to vector<16x1xf32>
    %17 = arith.divf %15, %16 : vector<16x1xf32>
    %18 = vector.broadcast %10 : vector<16x1xf32> to vector<16x32xf32>
    %19 = arith.subf %1, %18 : vector<16x32xf32>
    %cst_8 = arith.constant 9.99999974E-6 : f32
    %20 = vector.broadcast %cst_8 : f32 to vector<16x1xf32>
    %21 = arith.addf %17, %20 : vector<16x1xf32>
    %22 = math.rsqrt %21 : vector<16x1xf32>
    %23 = vector.broadcast %22 : vector<16x1xf32> to vector<16x32xf32>
    %24 = arith.mulf %19, %23 : vector<16x32xf32>
    %c0_9 = arith.constant 0 : index
    %c0_10 = arith.constant 0 : index
    %25 = vector.load %arg3[%c0_9, %c0_10] : memref<1x32xf32, #tpu.memory_space<vmem>>, vector<1x32xf32>
    %26 = vector.broadcast %25 : vector<1x32xf32> to vector<16x32xf32>
    %27 = arith.mulf %24, %26 : vector<16x32xf32>
    %c0_11 = arith.constant 0 : index
    %c0_12 = arith.constant 0 : index
    %28 = vector.load %arg4[%c0_11, %c0_12] : memref<1x32xf32, #tpu.memory_space<vmem>>, vector<1x32xf32>
    %29 = vector.broadcast %28 : vector<1x32xf32> to vector<16x32xf32>
    %30 = arith.addf %27, %29 : vector<16x32xf32>
    %cst_13 = arith.constant 1.000000e+00 : f32
    %31 = vector.broadcast %cst_13 : f32 to vector<1x32xf32>
    %32 = arith.addf %31, %5 : vector<1x32xf32>
    %33 = vector.broadcast %32 : vector<1x32xf32> to vector<16x32xf32>
    %34 = arith.mulf %30, %33 : vector<16x32xf32>
    %35 = vector.broadcast %4 : vector<1x32xf32> to vector<16x32xf32>
    %36 = arith.addf %34, %35 : vector<16x32xf32>
    %37 = arith.truncf %36 : vector<16x32xf32> to vector<16x32xbf16>
    %c0_14 = arith.constant 0 : index
    %c0_15 = arith.constant 0 : index
    %38 = vector.load %arg5[%c0_14, %c0_15] : memref<32x128xbf16, #tpu.memory_space<vmem>>, vector<32x128xbf16>
    %cst_16 = arith.constant dense<0.000000e+00> : vector<16x128xf32>
    %39 = tpu.matmul %37, %38, %cst_16 {dimension_numbers = #tpu.dot_dimension_numbers<[1], [0], [0], [1], [0, 0, 1, 1], [], []>} : vector<16x32xbf16>, vector<32x128xbf16>, vector<16x128xf32> -> vector<16x128xf32>
    %40 = vector.extract_strided_slice %39 {offsets = [0, 0], sizes = [16, 64], strides = [1, 1]} : vector<16x128xf32> to vector<16x64xf32>
    %41 = vector.extract_strided_slice %39 {offsets = [0, 64], sizes = [16, 64], strides = [1, 1]} : vector<16x128xf32> to vector<16x64xf32>
    %42 = arith.negf %41 : vector<16x64xf32>
    %43 = math.exp %42 : vector<16x64xf32>
    %cst_17 = arith.constant 1.000000e+00 : f32
    %44 = vector.broadcast %cst_17 : f32 to vector<16x64xf32>
    %45 = arith.addf %44, %43 : vector<16x64xf32>
    %46 = arith.divf %44, %45 : vector<16x64xf32>
    %47 = arith.mulf %41, %46 : vector<16x64xf32>
    %48 = arith.truncf %47 : vector<16x64xf32> to vector<16x64xbf16>
    %c0_18 = arith.constant 0 : index
    %c0_19 = arith.constant 0 : index
    %49 = vector.load %arg19[%c0_18, %c0_19] : memref<16x64xbf16, #tpu.memory_space<vmem>>, vector<16x64xbf16>
    tpu.vector_store %arg19[%c0_18, %c0_19], %48 {strides = array<i32>} : memref<16x64xbf16, #tpu.memory_space<vmem>>, vector<16x64xbf16>,
    %c0_20 = arith.constant 0 : index
    %c0_21 = arith.constant 0 : index
    %50 = vector.load %arg6[%c0_20, %c0_21] : memref<4x64xf32, #tpu.memory_space<vmem>>, vector<4x64xf32>
    %51 = tpu.iota {dimensions = array<i32: 0>} : vector<16x1xi32>
    %cst_22 = arith.constant 0.000000e+00 : f32
    %52 = vector.broadcast %cst_22 : f32 to vector<16x64xf32>
    %c0_23 = arith.constant 0 : index
    %c0_24 = arith.constant 0 : index
    %53 = vector.load %arg7[%c0_23, %c0_24] : memref<1x64xf32, #tpu.memory_space<vmem>>, vector<1x64xf32>
    %54 = vector.broadcast %53 : vector<1x64xf32> to vector<16x64xf32>
    %55 = arith.addf %52, %54 : vector<16x64xf32>
    %56 = vector.extract_strided_slice %50 {offsets = [3, 0], sizes = [1, 64], strides = [1, 1]} : vector<4x64xf32> to vector<1x64xf32>
    %57 = vector.broadcast %56 : vector<1x64xf32> to vector<16x64xf32>
    %58 = arith.mulf %57, %40 : vector<16x64xf32>
    %59 = arith.addf %55, %58 : vector<16x64xf32>
    %c1_i32 = arith.constant 1 : i32
    %60 = vector.broadcast %c1_i32 : i32 to vector<16x1xi32>
    %61 = arith.cmpi sge, %51, %60 : vector<16x1xi32>
    %c1_i32_25 = arith.constant 1 : i32
    %62 = tpu.dynamic_rotate %40 by %c1_i32_25 dim 0 : vector<16x64xf32>, i32 -> vector<16x64xf32>
    %cst_26 = arith.constant 0.000000e+00 : f32
    %63 = vector.shape_cast %61 : vector<16x1xi1> to vector<16x1xi1>
    %64 = vector.broadcast %63 : vector<16x1xi1> to vector<16x64xi1>
    %65 = vector.broadcast %cst_26 : f32 to vector<16x64xf32>
    %66 = arith.select %64, %62, %65 : vector<16x64xi1>, vector<16x64xf32>
    %67 = vector.extract_strided_slice %50 {offsets = [2, 0], sizes = [1, 64], strides = [1, 1]} : vector<4x64xf32> to vector<1x64xf32>
    %68 = vector.broadcast %67 : vector<1x64xf32> to vector<16x64xf32>
    %69 = arith.mulf %68, %66 : vector<16x64xf32>
    %70 = arith.addf %59, %69 : vector<16x64xf32>
    %c2_i32 = arith.constant 2 : i32
    %71 = vector.broadcast %c2_i32 : i32 to vector<16x1xi32>
    %72 = arith.cmpi sge, %51, %71 : vector<16x1xi32>
    %c2_i32_27 = arith.constant 2 : i32
    %73 = tpu.dynamic_rotate %40 by %c2_i32_27 dim 0 : vector<16x64xf32>, i32 -> vector<16x64xf32>
    %cst_28 = arith.constant 0.000000e+00 : f32
    %74 = vector.shape_cast %72 : vector<16x1xi1> to vector<16x1xi1>
    %75 = vector.broadcast %74 : vector<16x1xi1> to vector<16x64xi1>
    %76 = vector.broadcast %cst_28 : f32 to vector<16x64xf32>
    %77 = arith.select %75, %73, %76 : vector<16x64xi1>, vector<16x64xf32>
    %78 = vector.extract_strided_slice %50 {offsets = [1, 0], sizes = [1, 64], strides = [1, 1]} : vector<4x64xf32> to vector<1x64xf32>
    %79 = vector.broadcast %78 : vector<1x64xf32> to vector<16x64xf32>
    %80 = arith.mulf %79, %77 : vector<16x64xf32>
    %81 = arith.addf %70, %80 : vector<16x64xf32>
    %c3_i32 = arith.constant 3 : i32
    %82 = vector.broadcast %c3_i32 : i32 to vector<16x1xi32>
    %83 = arith.cmpi sge, %51, %82 : vector<16x1xi32>
    %c3_i32_29 = arith.constant 3 : i32
    %84 = tpu.dynamic_rotate %40 by %c3_i32_29 dim 0 : vector<16x64xf32>, i32 -> vector<16x64xf32>
    %cst_30 = arith.constant 0.000000e+00 : f32
    %85 = vector.shape_cast %83 : vector<16x1xi1> to vector<16x1xi1>
    %86 = vector.broadcast %85 : vector<16x1xi1> to vector<16x64xi1>
    %87 = vector.broadcast %cst_30 : f32 to vector<16x64xf32>
    %88 = arith.select %86, %84, %87 : vector<16x64xi1>, vector<16x64xf32>
    %89 = vector.extract_strided_slice %50 {offsets = [0, 0], sizes = [1, 64], strides = [1, 1]} : vector<4x64xf32> to vector<1x64xf32>
    %90 = vector.broadcast %89 : vector<1x64xf32> to vector<16x64xf32>
    %91 = arith.mulf %90, %88 : vector<16x64xf32>
    %92 = arith.addf %81, %91 : vector<16x64xf32>
    %93 = arith.negf %92 : vector<16x64xf32>
    %94 = math.exp %93 : vector<16x64xf32>
    %cst_31 = arith.constant 1.000000e+00 : f32
    %95 = vector.broadcast %cst_31 : f32 to vector<16x64xf32>
    %96 = arith.addf %95, %94 : vector<16x64xf32>
    %97 = arith.divf %95, %96 : vector<16x64xf32>
    %98 = arith.mulf %92, %97 : vector<16x64xf32>
    %c0_32 = arith.constant 0 : index
    %c0_33 = arith.constant 0 : index
    %99 = vector.load %arg11[%c0_32, %c0_33] : memref<1x64xf32, #tpu.memory_space<vmem>>, vector<1x64xf32>
    %100 = vector.broadcast %99 : vector<1x64xf32> to vector<16x64xf32>
    %101 = arith.mulf %98, %100 : vector<16x64xf32>
    %102 = arith.truncf %101 : vector<16x64xf32> to vector<16x64xbf16>
    %c0_34 = arith.constant 0 : index
    %c0_35 = arith.constant 0 : index
    %103 = vector.load %arg20[%c0_34, %c0_35] : memref<16x64xbf16, #tpu.memory_space<vmem>>, vector<16x64xbf16>
    tpu.vector_store %arg20[%c0_34, %c0_35], %102 {strides = array<i32>} : memref<16x64xbf16, #tpu.memory_space<vmem>>, vector<16x64xbf16>,
    %104 = arith.truncf %98 : vector<16x64xf32> to vector<16x64xbf16>
    %c0_36 = arith.constant 0 : index
    %c0_37 = arith.constant 0 : index
    %105 = vector.load %arg8[%c0_36, %c0_37] : memref<64x320xbf16, #tpu.memory_space<vmem>>, vector<64x320xbf16>
    %cst_38 = arith.constant dense<0.000000e+00> : vector<16x320xf32>
    %106 = tpu.matmul %104, %105, %cst_38 {dimension_numbers = #tpu.dot_dimension_numbers<[1], [0], [0], [1], [0, 0, 1, 1], [], []>} : vector<16x64xbf16>, vector<64x320xbf16>, vector<16x320xf32> -> vector<16x320xf32>
    %107 = vector.extract_strided_slice %106 {offsets = [0, 0], sizes = [16, 64], strides = [1, 1]} : vector<16x320xf32> to vector<16x64xf32>
    %c0_39 = arith.constant 0 : index
    %c0_40 = arith.constant 0 : index
    %108 = vector.load %arg9[%c0_39, %c0_40] : memref<1x64xf32, #tpu.memory_space<vmem>>, vector<1x64xf32>
    %109 = vector.broadcast %108 : vector<1x64xf32> to vector<16x64xf32>
    %110 = arith.addf %107, %109 : vector<16x64xf32>
    %cst_41 = arith.constant 2.000000e+01 : f32
    %111 = vector.broadcast %cst_41 : f32 to vector<16x64xf32>
    %112 = arith.cmpf ogt, %110, %111 : vector<16x64xf32>
    %113 = math.exp %110 : vector<16x64xf32>
    %114 = math.log1p %113 : vector<16x64xf32>
    %115 = arith.select %112, %110, %114 : vector<16x64xi1>, vector<16x64xf32>
    %c0_42 = arith.constant 0 : index
    %c0_43 = arith.constant 0 : index
    %116 = vector.load %arg14[%c0_42, %c0_43] : memref<16x64xf32, #tpu.memory_space<vmem>>, vector<16x64xf32>
    tpu.vector_store %arg14[%c0_42, %c0_43], %115 {strides = array<i32>} : memref<16x64xf32, #tpu.memory_space<vmem>>, vector<16x64xf32>,
    %117 = arith.mulf %115, %98 : vector<16x64xf32>
    %c0_44 = arith.constant 0 : index
    %c0_45 = arith.constant 0 : index
    %118 = vector.load %arg15[%c0_44, %c0_45] : memref<16x64xf32, #tpu.memory_space<vmem>>, vector<16x64xf32>
    tpu.vector_store %arg15[%c0_44, %c0_45], %117 {strides = array<i32>} : memref<16x64xf32, #tpu.memory_space<vmem>>, vector<16x64xf32>,
    %119 = vector.extract_strided_slice %106 {offsets = [0, 64], sizes = [16, 16], strides = [1, 1]} : vector<16x320xf32> to vector<16x16xf32>
    %120 = vector.extract_strided_slice %106 {offsets = [0, 192], sizes = [16, 16], strides = [1, 1]} : vector<16x320xf32> to vector<16x16xf32>
    %121 = vector.extract_strided_slice %119 {offsets = [0, 0], sizes = [8, 16], strides = [1, 1]} : vector<16x16xf32> to vector<8x16xf32>
    %122 = tpu.transpose %121, [1, 0] : vector<8x16xf32> -> vector<16x8xf32>
    %c0_46 = arith.constant 0 : index
    %c0_47 = arith.constant 0 : index
    %c0_48 = arith.constant 0 : index
    %123 = vector.load %arg16[%c0_46, %c0_47, %c0_48] : memref<2x16x8xf32, #tpu.memory_space<vmem>>, vector<1x16x8xf32>
    %124 = vector.shape_cast %123 : vector<1x16x8xf32> to vector<16x8xf32>
    %125 = vector.shape_cast %122 : vector<16x8xf32> to vector<1x16x8xf32>
    tpu.vector_store %arg16[%c0_46, %c0_47, %c0_48], %125 {strides = array<i32>} : memref<2x16x8xf32, #tpu.memory_space<vmem>>, vector<1x16x8xf32>,
    %126 = vector.extract_strided_slice %120 {offsets = [0, 0], sizes = [8, 16], strides = [1, 1]} : vector<16x16xf32> to vector<8x16xf32>
    %127 = tpu.transpose %126, [1, 0] : vector<8x16xf32> -> vector<16x8xf32>
    %c0_49 = arith.constant 0 : index
    %c0_50 = arith.constant 0 : index
    %c0_51 = arith.constant 0 : index
    %128 = vector.load %arg17[%c0_49, %c0_50, %c0_51] : memref<2x16x8xf32, #tpu.memory_space<vmem>>, vector<1x16x8xf32>
    %129 = vector.shape_cast %128 : vector<1x16x8xf32> to vector<16x8xf32>
    %130 = vector.shape_cast %127 : vector<16x8xf32> to vector<1x16x8xf32>
    tpu.vector_store %arg17[%c0_49, %c0_50, %c0_51], %130 {strides = array<i32>} : memref<2x16x8xf32, #tpu.memory_space<vmem>>, vector<1x16x8xf32>,
    %131 = vector.extract_strided_slice %119 {offsets = [8, 0], sizes = [8, 16], strides = [1, 1]} : vector<16x16xf32> to vector<8x16xf32>
    %132 = tpu.transpose %131, [1, 0] : vector<8x16xf32> -> vector<16x8xf32>
    %c1 = arith.constant 1 : index
    %c0_52 = arith.constant 0 : index
    %c0_53 = arith.constant 0 : index
    %133 = vector.load %arg16[%c1, %c0_52, %c0_53] : memref<2x16x8xf32, #tpu.memory_space<vmem>>, vector<1x16x8xf32>
    %134 = vector.shape_cast %133 : vector<1x16x8xf32> to vector<16x8xf32>
    %135 = vector.shape_cast %132 : vector<16x8xf32> to vector<1x16x8xf32>
    tpu.vector_store %arg16[%c1, %c0_52, %c0_53], %135 {strides = array<i32>} : memref<2x16x8xf32, #tpu.memory_space<vmem>>, vector<1x16x8xf32>,
    %136 = vector.extract_strided_slice %120 {offsets = [8, 0], sizes = [8, 16], strides = [1, 1]} : vector<16x16xf32> to vector<8x16xf32>
    %137 = tpu.transpose %136, [1, 0] : vector<8x16xf32> -> vector<16x8xf32>
    %c1_54 = arith.constant 1 : index
    %c0_55 = arith.constant 0 : index
    %c0_56 = arith.constant 0 : index
    %138 = vector.load %arg17[%c1_54, %c0_55, %c0_56] : memref<2x16x8xf32, #tpu.memory_space<vmem>>, vector<1x16x8xf32>
    %139 = vector.shape_cast %138 : vector<1x16x8xf32> to vector<16x8xf32>
    %140 = vector.shape_cast %137 : vector<16x8xf32> to vector<1x16x8xf32>
    tpu.vector_store %arg17[%c1_54, %c0_55, %c0_56], %140 {strides = array<i32>} : memref<2x16x8xf32, #tpu.memory_space<vmem>>, vector<1x16x8xf32>,
    %c0_57 = arith.constant 0 : index
    %c0_58 = arith.constant 0 : index
    %141 = vector.load %arg10[%c0_57, %c0_58] : memref<16x64xf32, #tpu.memory_space<vmem>>, vector<16x64xf32>
    %cst_59 = arith.constant 0.000000e+00 : f32
    %142 = vector.broadcast %cst_59 : f32 to vector<16x64xf32>
    %c0_i32 = arith.constant 0 : i32
    %c2_i32_60 = arith.constant 2 : i32
    %143 = arith.addi %c0_i32, %c2_i32_60 : i32
    %c1_i32_61 = arith.constant 1 : i32
    %144 = scf.for %arg21 = %c0_i32 to %143 step %c1_i32_61 iter_args(%arg22 = %142) -> (vector<16x64xf32>)  : i32 {
      %c8_i32 = arith.constant 8 : i32
      %163 = arith.muli %arg21, %c8_i32 : i32
      %164 = tpu.assume_multiple %163, 8 : i32
      %165 = arith.index_cast %164 : i32 to index
      %c0_78 = arith.constant 0 : index
      %166 = vector.load %arg14[%165, %c0_78] : memref<16x64xf32, #tpu.memory_space<vmem>>, vector<8x64xf32>
      %167 = arith.index_cast %164 : i32 to index
      %c0_79 = arith.constant 0 : index
      %168 = vector.load %arg15[%167, %c0_79] : memref<16x64xf32, #tpu.memory_space<vmem>>, vector<8x64xf32>
      %169 = arith.index_cast %arg21 : i32 to index
      %c0_80 = arith.constant 0 : index
      %c0_81 = arith.constant 0 : index
      %170 = vector.load %arg16[%169, %c0_80, %c0_81] : memref<2x16x8xf32, #tpu.memory_space<vmem>>, vector<1x16x8xf32>
      %171 = vector.shape_cast %170 : vector<1x16x8xf32> to vector<16x8xf32>
      %172 = arith.index_cast %arg21 : i32 to index
      %c0_82 = arith.constant 0 : index
      %c0_83 = arith.constant 0 : index
      %173 = vector.load %arg17[%172, %c0_82, %c0_83] : memref<2x16x8xf32, #tpu.memory_space<vmem>>, vector<1x16x8xf32>
      %174 = vector.shape_cast %173 : vector<1x16x8xf32> to vector<16x8xf32>
      %175 = vector.extract_strided_slice %166 {offsets = [0, 0], sizes = [1, 64], strides = [1, 1]} : vector<8x64xf32> to vector<1x64xf32>
      %176 = vector.broadcast %175 : vector<1x64xf32> to vector<16x64xf32>
      %177 = arith.mulf %176, %141 : vector<16x64xf32>
      %178 = math.exp %177 : vector<16x64xf32>
      %179 = vector.extract_strided_slice %166 {offsets = [1, 0], sizes = [1, 64], strides = [1, 1]} : vector<8x64xf32> to vector<1x64xf32>
      %180 = vector.broadcast %179 : vector<1x64xf32> to vector<16x64xf32>
      %181 = arith.mulf %180, %141 : vector<16x64xf32>
      %182 = math.exp %181 : vector<16x64xf32>
      %183 = vector.extract_strided_slice %166 {offsets = [2, 0], sizes = [1, 64], strides = [1, 1]} : vector<8x64xf32> to vector<1x64xf32>
      %184 = vector.broadcast %183 : vector<1x64xf32> to vector<16x64xf32>
      %185 = arith.mulf %184, %141 : vector<16x64xf32>
      %186 = math.exp %185 : vector<16x64xf32>
      %187 = vector.extract_strided_slice %166 {offsets = [3, 0], sizes = [1, 64], strides = [1, 1]} : vector<8x64xf32> to vector<1x64xf32>
      %188 = vector.broadcast %187 : vector<1x64xf32> to vector<16x64xf32>
      %189 = arith.mulf %188, %141 : vector<16x64xf32>
      %190 = math.exp %189 : vector<16x64xf32>
      %191 = vector.extract_strided_slice %166 {offsets = [4, 0], sizes = [1, 64], strides = [1, 1]} : vector<8x64xf32> to vector<1x64xf32>
      %192 = vector.broadcast %191 : vector<1x64xf32> to vector<16x64xf32>
      %193 = arith.mulf %192, %141 : vector<16x64xf32>
      %194 = math.exp %193 : vector<16x64xf32>
      %195 = vector.extract_strided_slice %166 {offsets = [5, 0], sizes = [1, 64], strides = [1, 1]} : vector<8x64xf32> to vector<1x64xf32>
      %196 = vector.broadcast %195 : vector<1x64xf32> to vector<16x64xf32>
      %197 = arith.mulf %196, %141 : vector<16x64xf32>
      %198 = math.exp %197 : vector<16x64xf32>
      %199 = vector.extract_strided_slice %166 {offsets = [6, 0], sizes = [1, 64], strides = [1, 1]} : vector<8x64xf32> to vector<1x64xf32>
      %200 = vector.broadcast %199 : vector<1x64xf32> to vector<16x64xf32>
      %201 = arith.mulf %200, %141 : vector<16x64xf32>
      %202 = math.exp %201 : vector<16x64xf32>
      %203 = vector.extract_strided_slice %166 {offsets = [7, 0], sizes = [1, 64], strides = [1, 1]} : vector<8x64xf32> to vector<1x64xf32>
      %204 = vector.broadcast %203 : vector<1x64xf32> to vector<16x64xf32>
      %205 = arith.mulf %204, %141 : vector<16x64xf32>
      %206 = math.exp %205 : vector<16x64xf32>
      %207 = vector.extract_strided_slice %171 {offsets = [0, 0], sizes = [16, 1], strides = [1, 1]} : vector<16x8xf32> to vector<16x1xf32>
      %208 = vector.extract_strided_slice %168 {offsets = [0, 0], sizes = [1, 64], strides = [1, 1]} : vector<8x64xf32> to vector<1x64xf32>
      %209 = vector.broadcast %207 : vector<16x1xf32> to vector<16x64xf32>
      %210 = vector.broadcast %208 : vector<1x64xf32> to vector<16x64xf32>
      %211 = arith.mulf %209, %210 : vector<16x64xf32>
      %212 = vector.extract_strided_slice %171 {offsets = [0, 1], sizes = [16, 1], strides = [1, 1]} : vector<16x8xf32> to vector<16x1xf32>
      %213 = vector.extract_strided_slice %168 {offsets = [1, 0], sizes = [1, 64], strides = [1, 1]} : vector<8x64xf32> to vector<1x64xf32>
      %214 = vector.broadcast %212 : vector<16x1xf32> to vector<16x64xf32>
      %215 = vector.broadcast %213 : vector<1x64xf32> to vector<16x64xf32>
      %216 = arith.mulf %214, %215 : vector<16x64xf32>
      %217 = vector.extract_strided_slice %171 {offsets = [0, 2], sizes = [16, 1], strides = [1, 1]} : vector<16x8xf32> to vector<16x1xf32>
      %218 = vector.extract_strided_slice %168 {offsets = [2, 0], sizes = [1, 64], strides = [1, 1]} : vector<8x64xf32> to vector<1x64xf32>
      %219 = vector.broadcast %217 : vector<16x1xf32> to vector<16x64xf32>
      %220 = vector.broadcast %218 : vector<1x64xf32> to vector<16x64xf32>
      %221 = arith.mulf %219, %220 : vector<16x64xf32>
      %222 = vector.extract_strided_slice %171 {offsets = [0, 3], sizes = [16, 1], strides = [1, 1]} : vector<16x8xf32> to vector<16x1xf32>
      %223 = vector.extract_strided_slice %168 {offsets = [3, 0], sizes = [1, 64], strides = [1, 1]} : vector<8x64xf32> to vector<1x64xf32>
      %224 = vector.broadcast %222 : vector<16x1xf32> to vector<16x64xf32>
      %225 = vector.broadcast %223 : vector<1x64xf32> to vector<16x64xf32>
      %226 = arith.mulf %224, %225 : vector<16x64xf32>
      %227 = vector.extract_strided_slice %171 {offsets = [0, 4], sizes = [16, 1], strides = [1, 1]} : vector<16x8xf32> to vector<16x1xf32>
      %228 = vector.extract_strided_slice %168 {offsets = [4, 0], sizes = [1, 64], strides = [1, 1]} : vector<8x64xf32> to vector<1x64xf32>
      %229 = vector.broadcast %227 : vector<16x1xf32> to vector<16x64xf32>
      %230 = vector.broadcast %228 : vector<1x64xf32> to vector<16x64xf32>
      %231 = arith.mulf %229, %230 : vector<16x64xf32>
      %232 = vector.extract_strided_slice %171 {offsets = [0, 5], sizes = [16, 1], strides = [1, 1]} : vector<16x8xf32> to vector<16x1xf32>
      %233 = vector.extract_strided_slice %168 {offsets = [5, 0], sizes = [1, 64], strides = [1, 1]} : vector<8x64xf32> to vector<1x64xf32>
      %234 = vector.broadcast %232 : vector<16x1xf32> to vector<16x64xf32>
      %235 = vector.broadcast %233 : vector<1x64xf32> to vector<16x64xf32>
      %236 = arith.mulf %234, %235 : vector<16x64xf32>
      %237 = vector.extract_strided_slice %171 {offsets = [0, 6], sizes = [16, 1], strides = [1, 1]} : vector<16x8xf32> to vector<16x1xf32>
      %238 = vector.extract_strided_slice %168 {offsets = [6, 0], sizes = [1, 64], strides = [1, 1]} : vector<8x64xf32> to vector<1x64xf32>
      %239 = vector.broadcast %237 : vector<16x1xf32> to vector<16x64xf32>
      %240 = vector.broadcast %238 : vector<1x64xf32> to vector<16x64xf32>
      %241 = arith.mulf %239, %240 : vector<16x64xf32>
      %242 = vector.extract_strided_slice %171 {offsets = [0, 7], sizes = [16, 1], strides = [1, 1]} : vector<16x8xf32> to vector<16x1xf32>
      %243 = vector.extract_strided_slice %168 {offsets = [7, 0], sizes = [1, 64], strides = [1, 1]} : vector<8x64xf32> to vector<1x64xf32>
      %244 = vector.broadcast %242 : vector<16x1xf32> to vector<16x64xf32>
      %245 = vector.broadcast %243 : vector<1x64xf32> to vector<16x64xf32>
      %246 = arith.mulf %244, %245 : vector<16x64xf32>
      %247 = arith.mulf %178, %arg22 : vector<16x64xf32>
      %248 = arith.addf %247, %211 : vector<16x64xf32>
      %249 = vector.extract_strided_slice %174 {offsets = [0, 0], sizes = [16, 1], strides = [1, 1]} : vector<16x8xf32> to vector<16x1xf32>
      %250 = vector.broadcast %249 : vector<16x1xf32> to vector<16x64xf32>
      %251 = arith.mulf %248, %250 : vector<16x64xf32>
      %cst_84 = arith.constant dense<0.000000e+00> : vector<64xf32>
      %252 = vector.multi_reduction <add>, %251, %cst_84 [0] : vector<16x64xf32> to vector<64xf32>
      %253 = vector.shape_cast %252 : vector<64xf32> to vector<1x64xf32>
      %254 = arith.mulf %182, %248 : vector<16x64xf32>
      %255 = arith.addf %254, %216 : vector<16x64xf32>
      %256 = vector.extract_strided_slice %174 {offsets = [0, 1], sizes = [16, 1], strides = [1, 1]} : vector<16x8xf32> to vector<16x1xf32>
      %257 = vector.broadcast %256 : vector<16x1xf32> to vector<16x64xf32>
      %258 = arith.mulf %255, %257 : vector<16x64xf32>
      %cst_85 = arith.constant dense<0.000000e+00> : vector<64xf32>
      %259 = vector.multi_reduction <add>, %258, %cst_85 [0] : vector<16x64xf32> to vector<64xf32>
      %260 = vector.shape_cast %259 : vector<64xf32> to vector<1x64xf32>
      %261 = arith.mulf %186, %255 : vector<16x64xf32>
      %262 = arith.addf %261, %221 : vector<16x64xf32>
      %263 = vector.extract_strided_slice %174 {offsets = [0, 2], sizes = [16, 1], strides = [1, 1]} : vector<16x8xf32> to vector<16x1xf32>
      %264 = vector.broadcast %263 : vector<16x1xf32> to vector<16x64xf32>
      %265 = arith.mulf %262, %264 : vector<16x64xf32>
      %cst_86 = arith.constant dense<0.000000e+00> : vector<64xf32>
      %266 = vector.multi_reduction <add>, %265, %cst_86 [0] : vector<16x64xf32> to vector<64xf32>
      %267 = vector.shape_cast %266 : vector<64xf32> to vector<1x64xf32>
      %268 = arith.mulf %190, %262 : vector<16x64xf32>
      %269 = arith.addf %268, %226 : vector<16x64xf32>
      %270 = vector.extract_strided_slice %174 {offsets = [0, 3], sizes = [16, 1], strides = [1, 1]} : vector<16x8xf32> to vector<16x1xf32>
      %271 = vector.broadcast %270 : vector<16x1xf32> to vector<16x64xf32>
      %272 = arith.mulf %269, %271 : vector<16x64xf32>
      %cst_87 = arith.constant dense<0.000000e+00> : vector<64xf32>
      %273 = vector.multi_reduction <add>, %272, %cst_87 [0] : vector<16x64xf32> to vector<64xf32>
      %274 = vector.shape_cast %273 : vector<64xf32> to vector<1x64xf32>
      %275 = arith.mulf %194, %269 : vector<16x64xf32>
      %276 = arith.addf %275, %231 : vector<16x64xf32>
      %277 = vector.extract_strided_slice %174 {offsets = [0, 4], sizes = [16, 1], strides = [1, 1]} : vector<16x8xf32> to vector<16x1xf32>
      %278 = vector.broadcast %277 : vector<16x1xf32> to vector<16x64xf32>
      %279 = arith.mulf %276, %278 : vector<16x64xf32>
      %cst_88 = arith.constant dense<0.000000e+00> : vector<64xf32>
      %280 = vector.multi_reduction <add>, %279, %cst_88 [0] : vector<16x64xf32> to vector<64xf32>
      %281 = vector.shape_cast %280 : vector<64xf32> to vector<1x64xf32>
      %282 = arith.mulf %198, %276 : vector<16x64xf32>
      %283 = arith.addf %282, %236 : vector<16x64xf32>
      %284 = vector.extract_strided_slice %174 {offsets = [0, 5], sizes = [16, 1], strides = [1, 1]} : vector<16x8xf32> to vector<16x1xf32>
      %285 = vector.broadcast %284 : vector<16x1xf32> to vector<16x64xf32>
      %286 = arith.mulf %283, %285 : vector<16x64xf32>
      %cst_89 = arith.constant dense<0.000000e+00> : vector<64xf32>
      %287 = vector.multi_reduction <add>, %286, %cst_89 [0] : vector<16x64xf32> to vector<64xf32>
      %288 = vector.shape_cast %287 : vector<64xf32> to vector<1x64xf32>
      %289 = arith.mulf %202, %283 : vector<16x64xf32>
      %290 = arith.addf %289, %241 : vector<16x64xf32>
      %291 = vector.extract_strided_slice %174 {offsets = [0, 6], sizes = [16, 1], strides = [1, 1]} : vector<16x8xf32> to vector<16x1xf32>
      %292 = vector.broadcast %291 : vector<16x1xf32> to vector<16x64xf32>
      %293 = arith.mulf %290, %292 : vector<16x64xf32>
      %cst_90 = arith.constant dense<0.000000e+00> : vector<64xf32>
      %294 = vector.multi_reduction <add>, %293, %cst_90 [0] : vector<16x64xf32> to vector<64xf32>
      %295 = vector.shape_cast %294 : vector<64xf32> to vector<1x64xf32>
      %296 = arith.mulf %206, %290 : vector<16x64xf32>
      %297 = arith.addf %296, %246 : vector<16x64xf32>
      %298 = vector.extract_strided_slice %174 {offsets = [0, 7], sizes = [16, 1], strides = [1, 1]} : vector<16x8xf32> to vector<16x1xf32>
      %299 = vector.broadcast %298 : vector<16x1xf32> to vector<16x64xf32>
      %300 = arith.mulf %297, %299 : vector<16x64xf32>
      %cst_91 = arith.constant dense<0.000000e+00> : vector<64xf32>
      %301 = vector.multi_reduction <add>, %300, %cst_91 [0] : vector<16x64xf32> to vector<64xf32>
      %302 = vector.shape_cast %301 : vector<64xf32> to vector<1x64xf32>
      %303 = tpu.concatenate %253, %260, %267, %274, %281, %288, %295, %302 in 0 : vector<1x64xf32>, vector<1x64xf32>, vector<1x64xf32>, vector<1x64xf32>, vector<1x64xf32>, vector<1x64xf32>, vector<1x64xf32>, vector<1x64xf32> -> vector<8x64xf32>
      %304 = arith.index_cast %164 : i32 to index
      %c0_92 = arith.constant 0 : index
      %305 = vector.load %arg18[%304, %c0_92] : memref<16x64xf32, #tpu.memory_space<vmem>>, vector<8x64xf32>
      tpu.vector_store %arg18[%304, %c0_92], %303 {strides = array<i32>} : memref<16x64xf32, #tpu.memory_space<vmem>>, vector<8x64xf32>,
      scf.yield %297 : vector<16x64xf32>
    }
    %c2_i32_62 = arith.constant 2 : i32
    %c0_63 = arith.constant 0 : index
    %c0_64 = arith.constant 0 : index
    %145 = vector.load %arg18[%c0_63, %c0_64] : memref<16x64xf32, #tpu.memory_space<vmem>>, vector<16x64xf32>
    %c0_65 = arith.constant 0 : index
    %c0_66 = arith.constant 0 : index
    %146 = vector.load %arg20[%c0_65, %c0_66] : memref<16x64xbf16, #tpu.memory_space<vmem>>, vector<16x64xbf16>
    %147 = arith.extf %146 : vector<16x64xbf16> to vector<16x64xf32>
    %148 = arith.addf %145, %147 : vector<16x64xf32>
    %c0_67 = arith.constant 0 : index
    %c0_68 = arith.constant 0 : index
    %149 = vector.load %arg19[%c0_67, %c0_68] : memref<16x64xbf16, #tpu.memory_space<vmem>>, vector<16x64xbf16>
    %150 = arith.extf %149 : vector<16x64xbf16> to vector<16x64xf32>
    %151 = arith.mulf %148, %150 : vector<16x64xf32>
    %152 = arith.truncf %151 : vector<16x64xf32> to vector<16x64xbf16>
    %c0_69 = arith.constant 0 : index
    %c0_70 = arith.constant 0 : index
    %153 = vector.load %arg12[%c0_69, %c0_70] : memref<64x32xbf16, #tpu.memory_space<vmem>>, vector<64x32xbf16>
    %cst_71 = arith.constant dense<0.000000e+00> : vector<16x32xf32>
    %154 = tpu.matmul %152, %153, %cst_71 {dimension_numbers = #tpu.dot_dimension_numbers<[1], [0], [0], [1], [0, 0, 1, 1], [], []>} : vector<16x64xbf16>, vector<64x32xbf16>, vector<16x32xf32> -> vector<16x32xf32>
    %c0_72 = arith.constant 0 : index
    %c0_73 = arith.constant 0 : index
    %c0_74 = arith.constant 0 : index
    %155 = vector.load %arg1[%c0_72, %c0_73, %c0_74] : memref<1x16x32xf32, #tpu.memory_space<vmem>>, vector<1x16x32xf32>
    %156 = vector.shape_cast %155 : vector<1x16x32xf32> to vector<16x32xf32>
    %157 = vector.broadcast %6 : vector<1x32xf32> to vector<16x32xf32>
    %158 = arith.mulf %157, %154 : vector<16x32xf32>
    %159 = arith.addf %156, %158 : vector<16x32xf32>
    %c0_75 = arith.constant 0 : index
    %c0_76 = arith.constant 0 : index
    %c0_77 = arith.constant 0 : index
    %160 = vector.load %arg13[%c0_75, %c0_76, %c0_77] : memref<1x16x32xf32, #tpu.memory_space<vmem>>, vector<1x16x32xf32>
    %161 = vector.shape_cast %160 : vector<1x16x32xf32> to vector<16x32xf32>
    %162 = vector.shape_cast %159 : vector<16x32xf32> to vector<1x16x32xf32>
    tpu.vector_store %arg13[%c0_75, %c0_76, %c0_77], %162 {strides = array<i32>} : memref<1x16x32xf32, #tpu.memory_space<vmem>>, vector<1x16x32xf32>,
    return
  }
  func.func @transform_0(%arg0: i32) -> (i32, i32, i32) {
    %c0_i32 = arith.constant 0 : i32
    %c0_i32_0 = arith.constant 0 : i32
    %c0_i32_1 = arith.constant 0 : i32
    return %arg0, %c0_i32, %c0_i32_0 : i32, i32, i32
  }
  func.func @transform_1(%arg0: i32) -> (i32, i32, i32) {
    %c0_i32 = arith.constant 0 : i32
    %c0_i32_0 = arith.constant 0 : i32
    %c0_i32_1 = arith.constant 0 : i32
    return %arg0, %c0_i32, %c0_i32_0 : i32, i32, i32
  }
  func.func @transform_2(%arg0: i32) -> (i32, i32) {
    %c0_i32 = arith.constant 0 : i32
    %c0_i32_0 = arith.constant 0 : i32
    %c0_i32_1 = arith.constant 0 : i32
    return %c0_i32, %c0_i32_0 : i32, i32
  }
  func.func @transform_3(%arg0: i32) -> (i32, i32) {
    %c0_i32 = arith.constant 0 : i32
    %c0_i32_0 = arith.constant 0 : i32
    %c0_i32_1 = arith.constant 0 : i32
    return %c0_i32, %c0_i32_0 : i32, i32
  }
  func.func @transform_4(%arg0: i32) -> (i32, i32) {
    %c0_i32 = arith.constant 0 : i32
    %c0_i32_0 = arith.constant 0 : i32
    %c0_i32_1 = arith.constant 0 : i32
    return %c0_i32, %c0_i32_0 : i32, i32
  }
  func.func @transform_5(%arg0: i32) -> (i32, i32) {
    %c0_i32 = arith.constant 0 : i32
    %c0_i32_0 = arith.constant 0 : i32
    %c0_i32_1 = arith.constant 0 : i32
    return %c0_i32, %c0_i32_0 : i32, i32
  }
  func.func @transform_6(%arg0: i32) -> (i32, i32) {
    %c0_i32 = arith.constant 0 : i32
    %c0_i32_0 = arith.constant 0 : i32
    %c0_i32_1 = arith.constant 0 : i32
    return %c0_i32, %c0_i32_0 : i32, i32
  }
  func.func @transform_7(%arg0: i32) -> (i32, i32) {
    %c0_i32 = arith.constant 0 : i32
    %c0_i32_0 = arith.constant 0 : i32
    %c0_i32_1 = arith.constant 0 : i32
    return %c0_i32, %c0_i32_0 : i32, i32
  }
  func.func @transform_8(%arg0: i32) -> (i32, i32) {
    %c0_i32 = arith.constant 0 : i32
    %c0_i32_0 = arith.constant 0 : i32
    %c0_i32_1 = arith.constant 0 : i32
    return %c0_i32, %c0_i32_0 : i32, i32
  }
  func.func @transform_9(%arg0: i32) -> (i32, i32) {
    %c0_i32 = arith.constant 0 : i32
    %c0_i32_0 = arith.constant 0 : i32
    %c0_i32_1 = arith.constant 0 : i32
    return %c0_i32, %c0_i32_0 : i32, i32
  }
  func.func @transform_10(%arg0: i32) -> (i32, i32) {
    %c0_i32 = arith.constant 0 : i32
    %c0_i32_0 = arith.constant 0 : i32
    %c0_i32_1 = arith.constant 0 : i32
    return %c0_i32, %c0_i32_0 : i32, i32
  }
  func.func @transform_11(%arg0: i32) -> (i32, i32) {
    %c0_i32 = arith.constant 0 : i32
    %c0_i32_0 = arith.constant 0 : i32
    %c0_i32_1 = arith.constant 0 : i32
    return %c0_i32, %c0_i32_0 : i32, i32
  }
  func.func @transform_12(%arg0: i32) -> (i32, i32, i32) {
    %c0_i32 = arith.constant 0 : i32
    %c0_i32_0 = arith.constant 0 : i32
    %c0_i32_1 = arith.constant 0 : i32
    return %arg0, %c0_i32, %c0_i32_0 : i32, i32, i32
  }
}

</mosaic_0001>

<llo_original>
// kernel: tpu_custom_call.1
$region0: #{tpu_custom_call.1}
  #allocation0 [shape = 'u32[]', space=smem, size = 0x4, offset = 0x4, fixed_abs, tag = 'smem constant byte address 0x4 - core index']
  #allocation1 [shape = 'u32[72,128]{1,0:T(1,128)}', space=vmem, size = 0x9000, scoped, tag = 'internal scratch']
  #allocation2 [shape = 'f32[16,64]{1,0:T(8,128)}', space=vmem, size = 0x2000, scoped, tag = 'scratch operand']
  #allocation3 [shape = 'f32[16,64]{1,0:T(8,128)}', space=vmem, size = 0x2000, scoped, tag = 'scratch operand']
  #allocation4 [shape = 'f32[2,16,8]{2,1,0:T(8,128)}', space=vmem, size = 0x4000, scoped, tag = 'scratch operand']
  #allocation5 [shape = 'f32[2,16,8]{2,1,0:T(8,128)}', space=vmem, size = 0x4000, scoped, tag = 'scratch operand']
  #allocation6 [shape = 'f32[16,64]{1,0:T(8,128)}', space=vmem, size = 0x2000, scoped, tag = 'scratch operand']
  #allocation7 [shape = 'bf16[16,64]{1,0:T(8,128)(2,1)}', space=vmem, size = 0x1000, scoped, tag = 'scratch operand']
  #allocation8 [shape = 'bf16[16,64]{1,0:T(8,128)(2,1)}', space=vmem, size = 0x1000, scoped, tag = 'scratch operand']
  %s0 = inlined_call_operand.vmem [shape: f32[2,16,32], index: 0, kind: input, shape index: {}]
  %s1 = inlined_call_operand.hbm [shape: f32[2,1,96], index: 1, kind: input, shape index: {}]
  %s2 = inlined_call_operand.hbm [shape: f32[1,32], index: 2, kind: input, shape index: {}]
  %s3 = inlined_call_operand.hbm [shape: f32[1,32], index: 3, kind: input, shape index: {}]
  %s4 = inlined_call_operand.vmem [shape: bf16[32,128], index: 4, kind: input, shape index: {}]
  %s5 = inlined_call_operand.vmem [shape: f32[4,64], index: 5, kind: input, shape index: {}]
  %s6 = inlined_call_operand.vmem [shape: f32[1,64], index: 6, kind: input, shape index: {}]
  %s7 = inlined_call_operand.hbm [shape: bf16[64,320], index: 7, kind: input, shape index: {}]
  %s8 = inlined_call_operand.vmem [shape: f32[1,64], index: 8, kind: input, shape index: {}]
  %s9 = inlined_call_operand.hbm [shape: f32[16,64], index: 9, kind: input, shape index: {}]
  %s10 = inlined_call_operand.vmem [shape: f32[1,64], index: 10, kind: input, shape index: {}]
  %s11 = inlined_call_operand.vmem [shape: bf16[64,32], index: 11, kind: input, shape index: {}]
  %s12 = inlined_call_operand.hbm [shape: f32[2,16,32], index: 12, kind: output, shape index: {}]
  %s13 = sld [smem:[#allocation0]]
  $region108: #{tpu_custom_call.1} parent=0
    _
  %s15 = ssub.s32 1, %s13
  %s16 = scalar_select 0, %s15, %s13
  $region1: #{tpu_custom_call.1} parent=0
    #allocation9 [shape = 'u8[1024]{0}', space=vmem, size = 0x400, scoped, tag = 'input window, operand 1']
    #allocation10 [shape = 's32[2]{0}', space=sflag, size = 0x8, scoped, tag = 'scoped memory for tpu_custom_call.1']
    #allocation11 [shape = 's32[2]{0}', space=sflag, size = 0x8, scoped, tag = 'scoped memory for tpu_custom_call.1']
    #allocation12 [shape = 'u8[512]{0}', space=vmem, size = 0x400, scoped, tag = 'input window, operand 2, single buffered']
    #allocation13 [shape = 's32[1]{0}', space=sflag, size = 0x4, scoped, tag = 'scoped memory for tpu_custom_call.1']
    #allocation14 [shape = 'u8[512]{0}', space=vmem, size = 0x400, scoped, tag = 'input window, operand 3, single buffered']
    #allocation15 [shape = 'u8[49152]{0}', space=vmem, size = 0xc000, scoped, tag = 'input window, operand 7, single buffered']
    #allocation16 [shape = 's32[1]{0}', space=sflag, size = 0x4, scoped, tag = 'scoped memory for tpu_custom_call.1']
    #allocation17 [shape = 'u8[8192]{0}', space=vmem, size = 0x2000, scoped, tag = 'input window, operand 9, single buffered']
    #allocation18 [shape = 'u8[16384]{0}', space=vmem, size = 0x4000, scoped, tag = 'output window, operand 0']
    %17 = vsyncpa [#allocation10], 0
    %s18 = scalar_lea.sflag [#allocation10], 1
    %19 = vsyncpa %s18, 0
    %20 = vsyncpa [#allocation13], 0
    %21 = vsyncpa [#allocation16], 0
    %22 = vsyncpa [#allocation11], 0
    %s23 = scalar_lea.sflag [#allocation11], 1
    %24 = vsyncpa %s23, 0
    loop: start=0, step=1, limit=4
    $region2: #{tpu_custom_call.1} parent=1 // loop_pre_header
      _
    $region3: #{tpu_custom_call.1} parent=1 // loop_header
      %s26 = sphi 0, %s30
      %p27 = scmp.ge.s32.totalorder %s26, 4
      %s36 = sphi 0, %s38
      %s39 = sphi 0, %s36
      %s40 = sphi 0, %s39
      %s56 = sphi 0, %s40
      %s62 = sphi 0, %s64
      %s65 = sphi 0, %s62
      %s66 = sphi 0, %s65
      %s82 = sphi 0, %s66
      %s86 = sphi 0, %s86
      %s88 = sphi 0, %s86
      %s89 = sphi 0, %s88
      %s103 = sphi 0, %s89
      %s107 = sphi 0, %s107
      %s109 = sphi 0, %s107
      %s110 = sphi 0, %s109
      %s124 = sphi 0, %s110
      %s128 = sphi 0, %s128
      %s130 = sphi 0, %s128
      %s131 = sphi 0, %s130
      %s145 = sphi 0, %s131
      %s149 = sphi 0, %s149
      %s151 = sphi 0, %s149
      %s152 = sphi 0, %s151
      %s166 = sphi 0, %s152
      %s170 = sphi 0, %s170
      %s172 = sphi 0, %s170
      %s173 = sphi 0, %s172
      %s187 = sphi 0, %s173
      %s191 = sphi 0, %s191
      %s193 = sphi 0, %s191
      %s194 = sphi 0, %s193
      %s208 = sphi 0, %s194
      %s212 = sphi 0, %s212
      %s214 = sphi 0, %s212
      %s215 = sphi 0, %s214
      %s229 = sphi 0, %s215
      %s233 = sphi 0, %s233
      %s235 = sphi 0, %s233
      %s236 = sphi 0, %s235
      %s250 = sphi 0, %s236
      %s254 = sphi 0, %s254
      %s256 = sphi 0, %s254
      %s257 = sphi 0, %s256
      %s271 = sphi 0, %s257
      %s275 = sphi 0, %s275
      %s277 = sphi 0, %s275
      %s278 = sphi 0, %s277
      %s292 = sphi 0, %s278
      %s298 = sphi 0, %s300
      %s301 = sphi 0, %s298
      %s302 = sphi 0, %s301
      %s318 = sphi 0, %s302
    $region4: #{tpu_custom_call.1} parent=1 // loop_header_branch
      %29 = sbr.rel (%p27) target = $region8
    $region5: #{tpu_custom_call.1} parent=1 // loop_body
      %s31 = ssub.s32 %s26, 1
      %s32 = ssub.s32 %s26, 2
      %s33 = sadd.s32 %s26, 1
      %s34 = ssub.s32 %s26, %s33
      %p35 = scmp.eq.s32.totalorder %s34, 0
      %s37 = sadd.s32 %s36, 1
      %s38 = scalar_select %p35, %s36, %s37
      %p41 = pneg %p35
      %p42 = scmp.eq.s32.totalorder %s26, 1
      %p43 = por %p41, %p42
      %p44 = scmp.ne.s32.totalorder %s36, %s39
      %p45 = scmp.eq.s32.totalorder %s26, 0
      %p46 = por %p44, %p45
      %p47 = scmp.ne.s32.totalorder %s36, %s39
      %p48 = scmp.eq.s32.totalorder %s31, 1
      %p49 = por %p47, %p48
      %p50 = scmp.ne.s32.totalorder %s39, %s40
      %p51 = scmp.eq.s32.totalorder %s31, 0
      %p52 = por %p50, %p51
      %p53 = scmp.ne.s32.totalorder %s39, %s40
      %p54 = scmp.eq.s32.totalorder %s32, 1
      %p55 = por %p53, %p54
      %p57 = scmp.ne.s32.totalorder %s40, %s56
      %p58 = scmp.eq.s32.totalorder %s32, 0
      %p59 = por %p57, %p58
      %s60 = ssub.s32 %s26, %s33
      %p61 = scmp.eq.s32.totalorder %s60, 0
      %s63 = sadd.s32 %s62, 1
      %s64 = scalar_select %p61, %s62, %s63
      %p67 = pneg %p61
      %p68 = scmp.eq.s32.totalorder %s26, 1
      %p69 = por %p67, %p68
      %p70 = scmp.ne.s32.totalorder %s62, %s65
      %p71 = scmp.eq.s32.totalorder %s26, 0
      %p72 = por %p70, %p71
      %p73 = scmp.ne.s32.totalorder %s62, %s65
      %p74 = scmp.eq.s32.totalorder %s31, 1
      %p75 = por %p73, %p74
      %p76 = scmp.ne.s32.totalorder %s65, %s66
      %p77 = scmp.eq.s32.totalorder %s31, 0
      %p78 = por %p76, %p77
      %p79 = scmp.ne.s32.totalorder %s65, %s66
      %p80 = scmp.eq.s32.totalorder %s32, 1
      %p81 = por %p79, %p80
      %p83 = scmp.ne.s32.totalorder %s66, %s82
      %p84 = scmp.eq.s32.totalorder %s32, 0
      %p85 = por %p83, %p84
      %s87 = sadd.s32 %s86, 1
      %p90 = scmp.eq.s32.totalorder %s26, 1
      %p91 = scmp.ne.s32.totalorder %s86, %s88
      %p92 = scmp.eq.s32.totalorder %s26, 0
      %p93 = por %p91, %p92
      %p94 = scmp.ne.s32.totalorder %s86, %s88
      %p95 = scmp.eq.s32.totalorder %s31, 1
      %p96 = por %p94, %p95
      %p97 = scmp.ne.s32.totalorder %s88, %s89
      %p98 = scmp.eq.s32.totalorder %s31, 0
      %p99 = por %p97, %p98
      %p100 = scmp.ne.s32.totalorder %s88, %s89
      %p101 = scmp.eq.s32.totalorder %s32, 1
      %p102 = por %p100, %p101
      %p104 = scmp.ne.s32.totalorder %s89, %s103
      %p105 = scmp.eq.s32.totalorder %s32, 0
      %p106 = por %p104, %p105
      %s108 = sadd.s32 %s107, 1
      %p111 = scmp.eq.s32.totalorder %s26, 1
      %p112 = scmp.ne.s32.totalorder %s107, %s109
      %p113 = scmp.eq.s32.totalorder %s26, 0
      %p114 = por %p112, %p113
      %p115 = scmp.ne.s32.totalorder %s107, %s109
      %p116 = scmp.eq.s32.totalorder %s31, 1
      %p117 = por %p115, %p116
      %p118 = scmp.ne.s32.totalorder %s109, %s110
      %p119 = scmp.eq.s32.totalorder %s31, 0
      %p120 = por %p118, %p119
      %p121 = scmp.ne.s32.totalorder %s109, %s110
      %p122 = scmp.eq.s32.totalorder %s32, 1
      %p123 = por %p121, %p122
      %p125 = scmp.ne.s32.totalorder %s110, %s124
      %p126 = scmp.eq.s32.totalorder %s32, 0
      %p127 = por %p125, %p126
      %s129 = sadd.s32 %s128, 1
      %p132 = scmp.eq.s32.totalorder %s26, 1
      %p133 = scmp.ne.s32.totalorder %s128, %s130
      %p134 = scmp.eq.s32.totalorder %s26, 0
      %p135 = por %p133, %p134
      %p136 = scmp.ne.s32.totalorder %s128, %s130
      %p137 = scmp.eq.s32.totalorder %s31, 1
      %p138 = por %p136, %p137
      %p139 = scmp.ne.s32.totalorder %s130, %s131
      %p140 = scmp.eq.s32.totalorder %s31, 0
      %p141 = por %p139, %p140
      %p142 = scmp.ne.s32.totalorder %s130, %s131
      %p143 = scmp.eq.s32.totalorder %s32, 1
      %p144 = por %p142, %p143
      %p146 = scmp.ne.s32.totalorder %s131, %s145
      %p147 = scmp.eq.s32.totalorder %s32, 0
      %p148 = por %p146, %p147
      %s150 = sadd.s32 %s149, 1
      %p153 = scmp.eq.s32.totalorder %s26, 1
      %p154 = scmp.ne.s32.totalorder %s149, %s151
      %p155 = scmp.eq.s32.totalorder %s26, 0
      %p156 = por %p154, %p155
      %p157 = scmp.ne.s32.totalorder %s149, %s151
      %p158 = scmp.eq.s32.totalorder %s31, 1
      %p159 = por %p157, %p158
      %p160 = scmp.ne.s32.totalorder %s151, %s152
      %p161 = scmp.eq.s32.totalorder %s31, 0
      %p162 = por %p160, %p161
      %p163 = scmp.ne.s32.totalorder %s151, %s152
      %p164 = scmp.eq.s32.totalorder %s32, 1
      %p165 = por %p163, %p164
      %p167 = scmp.ne.s32.totalorder %s152, %s166
      %p168 = scmp.eq.s32.totalorder %s32, 0
      %p169 = por %p167, %p168
      %s171 = sadd.s32 %s170, 1
      %p174 = scmp.eq.s32.totalorder %s26, 1
      %p175 = scmp.ne.s32.totalorder %s170, %s172
      %p176 = scmp.eq.s32.totalorder %s26, 0
      %p177 = por %p175, %p176
      %p178 = scmp.ne.s32.totalorder %s170, %s172
      %p179 = scmp.eq.s32.totalorder %s31, 1
      %p180 = por %p178, %p179
      %p181 = scmp.ne.s32.totalorder %s172, %s173
      %p182 = scmp.eq.s32.totalorder %s31, 0
      %p183 = por %p181, %p182
      %p184 = scmp.ne.s32.totalorder %s172, %s173
      %p185 = scmp.eq.s32.totalorder %s32, 1
      %p186 = por %p184, %p185
      %p188 = scmp.ne.s32.totalorder %s173, %s187
      %p189 = scmp.eq.s32.totalorder %s32, 0
      %p190 = por %p188, %p189
      %s192 = sadd.s32 %s191, 1
      %p195 = scmp.eq.s32.totalorder %s26, 1
      %p196 = scmp.ne.s32.totalorder %s191, %s193
      %p197 = scmp.eq.s32.totalorder %s26, 0
      %p198 = por %p196, %p197
      %p199 = scmp.ne.s32.totalorder %s191, %s193
      %p200 = scmp.eq.s32.totalorder %s31, 1
      %p201 = por %p199, %p200
      %p202 = scmp.ne.s32.totalorder %s193, %s194
      %p203 = scmp.eq.s32.totalorder %s31, 0
      %p204 = por %p202, %p203
      %p205 = scmp.ne.s32.totalorder %s193, %s194
      %p206 = scmp.eq.s32.totalorder %s32, 1
      %p207 = por %p205, %p206
      %p209 = scmp.ne.s32.totalorder %s194, %s208
      %p210 = scmp.eq.s32.totalorder %s32, 0
      %p211 = por %p209, %p210
      %s213 = sadd.s32 %s212, 1
      %p216 = scmp.eq.s32.totalorder %s26, 1
      %p217 = scmp.ne.s32.totalorder %s212, %s214
      %p218 = scmp.eq.s32.totalorder %s26, 0
      %p219 = por %p217, %p218
      %p220 = scmp.ne.s32.totalorder %s212, %s214
      %p221 = scmp.eq.s32.totalorder %s31, 1
      %p222 = por %p220, %p221
      %p223 = scmp.ne.s32.totalorder %s214, %s215
      %p224 = scmp.eq.s32.totalorder %s31, 0
      %p225 = por %p223, %p224
      %p226 = scmp.ne.s32.totalorder %s214, %s215
      %p227 = scmp.eq.s32.totalorder %s32, 1
      %p228 = por %p226, %p227
      %p230 = scmp.ne.s32.totalorder %s215, %s229
      %p231 = scmp.eq.s32.totalorder %s32, 0
      %p232 = por %p230, %p231
      %s234 = sadd.s32 %s233, 1
      %p237 = scmp.eq.s32.totalorder %s26, 1
      %p238 = scmp.ne.s32.totalorder %s233, %s235
      %p239 = scmp.eq.s32.totalorder %s26, 0
      %p240 = por %p238, %p239
      %p241 = scmp.ne.s32.totalorder %s233, %s235
      %p242 = scmp.eq.s32.totalorder %s31, 1
      %p243 = por %p241, %p242
      %p244 = scmp.ne.s32.totalorder %s235, %s236
      %p245 = scmp.eq.s32.totalorder %s31, 0
      %p246 = por %p244, %p245
      %p247 = scmp.ne.s32.totalorder %s235, %s236
      %p248 = scmp.eq.s32.totalorder %s32, 1
      %p249 = por %p247, %p248
      %p251 = scmp.ne.s32.totalorder %s236, %s250
      %p252 = scmp.eq.s32.totalorder %s32, 0
      %p253 = por %p251, %p252
      %s255 = sadd.s32 %s254, 1
      %p258 = scmp.eq.s32.totalorder %s26, 1
      %p259 = scmp.ne.s32.totalorder %s254, %s256
      %p260 = scmp.eq.s32.totalorder %s26, 0
      %p261 = por %p259, %p260
      %p262 = scmp.ne.s32.totalorder %s254, %s256
      %p263 = scmp.eq.s32.totalorder %s31, 1
      %p264 = por %p262, %p263
      %p265 = scmp.ne.s32.totalorder %s256, %s257
      %p266 = scmp.eq.s32.totalorder %s31, 0
      %p267 = por %p265, %p266
      %p268 = scmp.ne.s32.totalorder %s256, %s257
      %p269 = scmp.eq.s32.totalorder %s32, 1
      %p270 = por %p268, %p269
      %p272 = scmp.ne.s32.totalorder %s257, %s271
      %p273 = scmp.eq.s32.totalorder %s32, 0
      %p274 = por %p272, %p273
      %s276 = sadd.s32 %s275, 1
      %p279 = scmp.eq.s32.totalorder %s26, 1
      %p280 = scmp.ne.s32.totalorder %s275, %s277
      %p281 = scmp.eq.s32.totalorder %s26, 0
      %p282 = por %p280, %p281
      %p283 = scmp.ne.s32.totalorder %s275, %s277
      %p284 = scmp.eq.s32.totalorder %s31, 1
      %p285 = por %p283, %p284
      %p286 = scmp.ne.s32.totalorder %s277, %s278
      %p287 = scmp.eq.s32.totalorder %s31, 0
      %p288 = por %p286, %p287
      %p289 = scmp.ne.s32.totalorder %s277, %s278
      %p290 = scmp.eq.s32.totalorder %s32, 1
      %p291 = por %p289, %p290
      %p293 = scmp.ne.s32.totalorder %s278, %s292
      %p294 = scmp.eq.s32.totalorder %s32, 0
      %p295 = por %p293, %p294
      %s296 = ssub.s32 %s26, %s33
      %p297 = scmp.eq.s32.totalorder %s296, 0
      %s299 = sadd.s32 %s298, 1
      %s300 = scalar_select %p297, %s298, %s299
      %p303 = pneg %p297
      %p304 = scmp.eq.s32.totalorder %s26, 1
      %p305 = por %p303, %p304
      %p306 = scmp.ne.s32.totalorder %s298, %s301
      %p307 = scmp.eq.s32.totalorder %s26, 0
      %p308 = por %p306, %p307
      %p309 = scmp.ne.s32.totalorder %s298, %s301
      %p310 = scmp.eq.s32.totalorder %s31, 1
      %p311 = por %p309, %p310
      %p312 = scmp.ne.s32.totalorder %s301, %s302
      %p313 = scmp.eq.s32.totalorder %s31, 0
      %p314 = por %p312, %p313
      %p315 = scmp.ne.s32.totalorder %s301, %s302
      %p316 = scmp.eq.s32.totalorder %s32, 1
      %p317 = por %p315, %p316
      %p319 = scmp.ne.s32.totalorder %s302, %s318
      %p320 = scmp.eq.s32.totalorder %s32, 0
      %p321 = por %p319, %p320
      %p322 = scmp.le.s32.totalorder 1, %s26
      %p323 = scmp.lt.s32.totalorder %s26, 3
      %p324 = pnand %p322, %p323
      %p325 = pneg %p324
      // Predicated region
      $region9: #{tpu_custom_call.1} parent=5 // pred_check
        _
      $region10: #{tpu_custom_call.1} parent=5 // pred_check_branch
        %327 = sbr.rel (%p324) target = $region12
      $region11: #{tpu_custom_call.1} parent=5 // pred_region
        %s328 = ssub.s32 %s26, 1
        // Predicated region
        $region13: #{tpu_custom_call.1} parent=11 // pred_check
          %p329 = pneg %p99
        $region14: #{tpu_custom_call.1} parent=11 // pred_check_branch
          %331 = sbr.rel (%p329) target = $region16
        $region15: #{tpu_custom_call.1} parent=11 // pred_region
          %333 = vsyncadd [#allocation13], 0
          %s335 = sshll.u32 %s2, 4
          %s336 = int_to_ptr.hbm [resolvable:$true] %s335
          %s337 = sshll.u32 [#allocation12], 4
          %s338 = int_to_ptr.vmem [resolvable:$true] %s337
          %340 = dma.hbm_to_vmem [thread:$0]  %s336, 16, %s338, [#allocation13]
        $region16: #{tpu_custom_call.1} parent=11 // pred_fallthru
          _
        // Predicated region
        $region17: #{tpu_custom_call.1} parent=11 // pred_check
          %p341 = pneg %p120
        $region18: #{tpu_custom_call.1} parent=11 // pred_check_branch
          %343 = sbr.rel (%p341) target = $region20
        $region19: #{tpu_custom_call.1} parent=11 // pred_region
          %345 = vsyncadd [#allocation13], 0
          %s347 = sshll.u32 %s3, 4
          %s348 = int_to_ptr.hbm [resolvable:$true] %s347
          %s349 = sshll.u32 [#allocation14], 4
          %s350 = int_to_ptr.vmem [resolvable:$true] %s349
          %352 = dma.hbm_to_vmem [thread:$0]  %s348, 16, %s350, [#allocation13]
        $region20: #{tpu_custom_call.1} parent=11 // pred_fallthru
          _
        // Predicated region
        $region21: #{tpu_custom_call.1} parent=11 // pred_check
          %p353 = pneg %p141
        $region22: #{tpu_custom_call.1} parent=11 // pred_check_branch
          %355 = sbr.rel (%p353) target = $region24
        $region23: #{tpu_custom_call.1} parent=11 // pred_region
          _
        $region24: #{tpu_custom_call.1} parent=11 // pred_fallthru
          _
        // Predicated region
        $region25: #{tpu_custom_call.1} parent=11 // pred_check
          %p356 = pneg %p162
        $region26: #{tpu_custom_call.1} parent=11 // pred_check_branch
          %358 = sbr.rel (%p356) target = $region28
        $region27: #{tpu_custom_call.1} parent=11 // pred_region
          _
        $region28: #{tpu_custom_call.1} parent=11 // pred_fallthru
          _
        // Predicated region
        $region29: #{tpu_custom_call.1} parent=11 // pred_check
          %p359 = pneg %p183
        $region30: #{tpu_custom_call.1} parent=11 // pred_check_branch
          %361 = sbr.rel (%p359) target = $region32
        $region31: #{tpu_custom_call.1} parent=11 // pred_region
          _
        $region32: #{tpu_custom_call.1} parent=11 // pred_fallthru
          _
        // Predicated region
        $region33: #{tpu_custom_call.1} parent=11 // pred_check
          %p362 = pneg %p204
        $region34: #{tpu_custom_call.1} parent=11 // pred_check_branch
          %364 = sbr.rel (%p362) target = $region36
        $region35: #{tpu_custom_call.1} parent=11 // pred_region
          %366 = vsyncadd [#allocation16], 0
          %s367 = sshll.u32 %s7, 4
          %s368 = int_to_ptr.hbm [resolvable:$true] %s367
          %s369 = sshll.u32 [#allocation15], 4
          %s370 = int_to_ptr.vmem [resolvable:$true] %s369
          %375 = dma.hbm_to_vmem [thread:$0]  %s368, 1536, %s370, [#allocation16], 192, 192, 12
        $region36: #{tpu_custom_call.1} parent=11 // pred_fallthru
          _
        // Predicated region
        $region37: #{tpu_custom_call.1} parent=11 // pred_check
          %p376 = pneg %p225
        $region38: #{tpu_custom_call.1} parent=11 // pred_check_branch
          %378 = sbr.rel (%p376) target = $region40
        $region39: #{tpu_custom_call.1} parent=11 // pred_region
          _
        $region40: #{tpu_custom_call.1} parent=11 // pred_fallthru
          _
        // Predicated region
        $region41: #{tpu_custom_call.1} parent=11 // pred_check
          %p379 = pneg %p246
        $region42: #{tpu_custom_call.1} parent=11 // pred_check_branch
          %381 = sbr.rel (%p379) target = $region44
        $region43: #{tpu_custom_call.1} parent=11 // pred_region
          %383 = vsyncadd [#allocation16], 0
          %s384 = sshll.u32 %s9, 4
          %s385 = int_to_ptr.hbm [resolvable:$true] %s384
          %s386 = sshll.u32 [#allocation17], 4
          %s387 = int_to_ptr.vmem [resolvable:$true] %s386
          %392 = dma.hbm_to_vmem [thread:$0]  %s385, 256, %s387, [#allocation16], 128, 128, 8
        $region44: #{tpu_custom_call.1} parent=11 // pred_fallthru
          _
        // Predicated region
        $region45: #{tpu_custom_call.1} parent=11 // pred_check
          %p393 = pneg %p267
        $region46: #{tpu_custom_call.1} parent=11 // pred_check_branch
          %395 = sbr.rel (%p393) target = $region48
        $region47: #{tpu_custom_call.1} parent=11 // pred_region
          _
        $region48: #{tpu_custom_call.1} parent=11 // pred_fallthru
          _
        // Predicated region
        $region49: #{tpu_custom_call.1} parent=11 // pred_check
          %p396 = pneg %p288
        $region50: #{tpu_custom_call.1} parent=11 // pred_check_branch
          %398 = sbr.rel (%p396) target = $region52
        $region51: #{tpu_custom_call.1} parent=11 // pred_region
          _
        $region52: #{tpu_custom_call.1} parent=11 // pred_fallthru
          _
      $region12: #{tpu_custom_call.1} parent=5 // pred_fallthru
        _
      %p399 = scmp.lt.s32.totalorder %s26, 2
      // Predicated region
      $region53: #{tpu_custom_call.1} parent=5 // pred_check
        %p400 = pneg %p399
      $region54: #{tpu_custom_call.1} parent=5 // pred_check_branch
        %402 = sbr.rel (%p400) target = $region56
      $region55: #{tpu_custom_call.1} parent=5 // pred_region
        // Predicated region
        $region57: #{tpu_custom_call.1} parent=55 // pred_check
          %p403 = pneg %p46
        $region58: #{tpu_custom_call.1} parent=55 // pred_check_branch
          %405 = sbr.rel (%p403) target = $region60
        $region59: #{tpu_custom_call.1} parent=55 // pred_region
          %p406 = scmp.lt.s32.totalorder %s26, 1
          %s407 = scalar_select %p406, %s26, 1
          %s408 = smul.addr %s407, 2
          %s409 = smul.addr %s408, 8
          %s410 = scalar_lea.vmem %s0, %s409
        $region60: #{tpu_custom_call.1} parent=55 // pred_fallthru
          _
        // Predicated region
        $region61: #{tpu_custom_call.1} parent=55 // pred_check
          %p411 = pneg %p72
        $region62: #{tpu_custom_call.1} parent=55 // pred_check_branch
          %413 = sbr.rel (%p411) target = $region64
        $region63: #{tpu_custom_call.1} parent=55 // pred_region
          %s414 = sand.u32 %s62, 1
          %s415 = scalar_lea.sflag [#allocation10], %s414
          %s416 = sand.u32 %s62, 1
          %s417 = scalar_lea.vmem [#allocation9], %s416
          %419 = vsyncadd %s415, 0
          %s420 = scalar_lea.hbm %s1, %s26
          %s422 = sshll.u32 %s420, 4
          %s423 = int_to_ptr.hbm [resolvable:$true] %s422
          %s424 = sshll.u32 %s417, 4
          %s425 = int_to_ptr.vmem [resolvable:$true] %s424
          %427 = dma.hbm_to_vmem [thread:$0]  %s423, 16, %s425, %s415
        $region64: #{tpu_custom_call.1} parent=55 // pred_fallthru
          _
      $region56: #{tpu_custom_call.1} parent=5 // pred_fallthru
        _
      %p428 = scmp.le.s32.totalorder 1, %s26
      %p429 = scmp.lt.s32.totalorder %s26, 3
      %p430 = pnand %p428, %p429
      %p431 = pneg %p430
      // Predicated region
      $region65: #{tpu_custom_call.1} parent=5 // pred_check
        _
      $region66: #{tpu_custom_call.1} parent=5 // pred_check_branch
        %433 = sbr.rel (%p430) target = $region68
      $region67: #{tpu_custom_call.1} parent=5 // pred_region
        %s434 = ssub.s32 %s26, 1
        %s435 = sand.u32 %s65, 1
        %s436 = scalar_lea.sflag [#allocation10], %s435
        %s437 = sand.u32 %s65, 1
        %s438 = scalar_lea.vmem [#allocation9], %s437
        // Predicated region
        $region69: #{tpu_custom_call.1} parent=67 // pred_check
          %p439 = pneg %p78
        $region70: #{tpu_custom_call.1} parent=67 // pred_check_branch
          %441 = sbr.rel (%p439) target = $region72
        $region71: #{tpu_custom_call.1} parent=67 // pred_region
          %443 = dma.done %s436, 16
        $region72: #{tpu_custom_call.1} parent=67 // pred_fallthru
          _
        // Predicated region
        $region73: #{tpu_custom_call.1} parent=67 // pred_check
          %p444 = pneg %p99
        $region74: #{tpu_custom_call.1} parent=67 // pred_check_branch
          %446 = sbr.rel (%p444) target = $region76
        $region75: #{tpu_custom_call.1} parent=67 // pred_region
          %448 = dma.done [#allocation13], 16
        $region76: #{tpu_custom_call.1} parent=67 // pred_fallthru
          _
        // Predicated region
        $region77: #{tpu_custom_call.1} parent=67 // pred_check
          %p449 = pneg %p120
        $region78: #{tpu_custom_call.1} parent=67 // pred_check_branch
          %451 = sbr.rel (%p449) target = $region80
        $region79: #{tpu_custom_call.1} parent=67 // pred_region
          %453 = dma.done [#allocation13], 16
        $region80: #{tpu_custom_call.1} parent=67 // pred_fallthru
          _
        // Predicated region
        $region81: #{tpu_custom_call.1} parent=67 // pred_check
          %p454 = pneg %p204
        $region82: #{tpu_custom_call.1} parent=67 // pred_check_branch
          %456 = sbr.rel (%p454) target = $region84
        $region83: #{tpu_custom_call.1} parent=67 // pred_region
          %458 = dma.done [#allocation16], 1536
        $region84: #{tpu_custom_call.1} parent=67 // pred_fallthru
          _
        // Predicated region
        $region85: #{tpu_custom_call.1} parent=67 // pred_check
          %p459 = pneg %p246
        $region86: #{tpu_custom_call.1} parent=67 // pred_check_branch
          %461 = sbr.rel (%p459) target = $region88
        $region87: #{tpu_custom_call.1} parent=67 // pred_region
          %463 = dma.done [#allocation16], 256
        $region88: #{tpu_custom_call.1} parent=67 // pred_fallthru
          _
        %p464 = scmp.lt.s32.totalorder %s31, 1
        %s465 = scalar_select %p464, %s31, 1
        %s466 = smul.addr %s465, 2
        %s467 = smul.addr %s466, 8
        %s468 = scalar_lea.vmem %s0, %s467
        %p469 = pneg %p52
        %p470 = pneg %p49
        %s471 = sand.u32 %s65, 1
        %s472 = scalar_lea.sflag [#allocation10], %s471
        %s473 = sand.u32 %s65, 1
        %s474 = scalar_lea.vmem [#allocation9], %s473
        %p475 = pneg %p78
        %p476 = pneg %p75
        %p477 = pneg %p99
        %p478 = pneg %p96
        %p479 = pneg %p120
        %p480 = pneg %p117
        %p481 = pneg %p141
        %p482 = pneg %p138
        %p483 = pneg %p162
        %p484 = pneg %p159
        %p485 = pneg %p183
        %p486 = pneg %p180
        %p487 = pneg %p204
        %p488 = pneg %p201
        %p489 = pneg %p225
        %p490 = pneg %p222
        %p491 = pneg %p246
        %p492 = pneg %p243
        %p493 = pneg %p267
        %p494 = pneg %p264
        %p495 = pneg %p288
        %p496 = pneg %p285
        %p497 = pneg %p314
        %p498 = pneg %p311
        %s499 = sand.u32 %s301, 1
        %s500 = scalar_lea.sflag [#allocation11], %s499
        %s501 = sand.u32 %s301, 1
        %s502 = smul.addr %s501, 16
        %s503 = scalar_lea.vmem [#allocation18], %s502
        %p504 = scmp.lt.s32.totalorder %s31, 1
        %s505 = scalar_select %p504, %s31, 1
        %s506 = smul.addr %s505, 2
        %s507 = smul.addr %s506, 8
        %s508 = scalar_lea.vmem %s0, %s507
        %v510 = vld [vmem:[%s508] sm:$0xff]
        %v511 = vld [vmem:[%s508 + $0x8] sm:$0xff]
        %v512 = vld [vmem:[%s438] sm:$0x1]
        %vm513 = vcmask 261120
        %v514 = vsel %vm513, %v510, 0.0
        %515 = vadd.xlane.f32.xlu0 %v514
        %v516 = vpop.xlane.xlu0 %515
        %v517 = vsel %vm513, %v511, 0.0
        %518 = vadd.xlane.f32.xlu0 %v517
        %v519 = vpop.xlane.xlu0 %518
        %v520 = vrcp.pop 32.0
        %v521 = vmul.f32 32.0, %v520
        %v522 = vsub.f32 1.0, %v521
        %v523 = vmul.f32 %v520, %v522
        %v524 = vadd.f32 %v520, %v523
        %vm525 = vweird.f32 %v520
        %v526 = vsel %vm525, %v520, %v524
        %v527 = vmul.f32 %v516, %v526
        %v528 = vmul.f32 %v519, %v526
        %v529 = vsub.f32 %v510, %v527
        %v530 = vsub.f32 %v511, %v528
        %v531 = vmul.f32 %v529, %v529
        %v532 = vmul.f32 %v530, %v530
        %v533 = vsel %vm513, %v531, 0.0
        %534 = vadd.xlane.f32.xlu0 %v533
        %v535 = vpop.xlane.xlu0 %534
        %v536 = vsel %vm513, %v532, 0.0
        %537 = vadd.xlane.f32.xlu0 %v536
        %v538 = vpop.xlane.xlu0 %537
        %v539 = vmul.f32 %v535, %v526
        %v540 = vmul.f32 %v538, %v526
        %v541 = vadd.f32 %v539, 1e-05
        %v542 = vadd.f32 %v540, 1e-05
        %v543 = vrsqrt.pop %v541
        %v544 = vmul.f32 %v543, %v541
        %v545 = vmul.f32 %v544, %v543
        %v546 = vmul.f32 0.5, %v545
        %v547 = vsub.f32 1.5, %v546
        %v548 = vmul.f32 %v543, %v547
        %vm549 = vweird.f32 %v541
        %vm550 = vweird.f32 %v543
        %vm551 = vmor %vm549, %vm550
        %v552 = vsel %vm551, %v543, %v548
        %v553 = vrsqrt.pop %v542
        %v554 = vmul.f32 %v553, %v542
        %v555 = vmul.f32 %v554, %v553
        %v556 = vmul.f32 0.5, %v555
        %v557 = vsub.f32 1.5, %v556
        %v558 = vmul.f32 %v553, %v557
        %vm559 = vweird.f32 %v542
        %vm560 = vweird.f32 %v553
        %vm561 = vmor %vm559, %vm560
        %v562 = vsel %vm561, %v553, %v558
        %v563 = vmul.f32 %v529, %v552
        %v564 = vmul.f32 %v530, %v562
        %v565 = vld [vmem:[#allocation12] sm:$0x1]
        %v567 = vperm.slane %v565, 0
        %v569 = vmul.f32 %v563, %v567
        %v570 = vmul.f32 %v564, %v567
        %v571 = vld [vmem:[#allocation14] sm:$0x1]
        %v573 = vperm.slane %v571, 0
        %v575 = vadd.f32 %v569, %v573
        %v576 = vadd.f32 %v570, %v573
        %v577 = vadd.f32 %v512, 1.0
        %v579 = vperm.slane %v577, 0
        %580 = vrot.lane.b32.xlu0 %v579, 96
        %v581 = vpop.permute.xlu0 %580
        %v583 = vmul.f32 %v575, %v581
        %v584 = vmul.f32 %v576, %v581
        %v586 = vperm.slane %v512, 0
        %v588 = vadd.f32 %v583, %v586
        %v589 = vadd.f32 %v584, %v586
        %v590 = vpack.c.bf16 %v589, %v588
        %v591 = vld [vmem:[%s4] sm:$0xf]
        %v592 = vld [vmem:[%s4 + $0x4] sm:$0xf]
        %v593 = vld [vmem:[%s4 + $0x8] sm:$0xf]
        %v594 = vld [vmem:[%s4 + $0xc] sm:$0xf]
        %v599 = vunpack.c.l.b16 %v591
        %v600 = vunpack.c.l.b16 %v592
        %v601 = vunpack.c.l.b16 %v593
        %v602 = vunpack.c.l.b16 %v594
        %v603 = vpack.c.b16 %v600, %v599
        %v604 = vpack.c.b16 %v602, %v601
        %v608 = vsel %vm513, %v590, 0
        %610 = vmatpush.bf16.msra.mxu0 0
        %611 = vmatpush.bf16.msra.mxu0 0
        %612 = vmatpush.bf16.msra.mxu0 0
        %613 = vmatpush.bf16.msra.mxu0 0
        %614 = vmatpush.bf16.msra.mxu0 0
        %615 = vmatpush.bf16.msra.mxu0 0
        %616 = vmatpush.bf16.msra.mxu0 %v604
        %617 = vmatpush.bf16.msra.mxu0 %v603
        %618 = vmatmul.bf16.gmra.mxu0 %v608
        %v619 = vpop.f32.mrf.mxu0
        %v620 = vadd.f32 0.0, %v619
        %v621 = vpop.f32.mrf.mxu0
        %v622 = vadd.f32 0.0, %v621
        %623 = vdwg.mxu0
        %v624 = vxor.u32 %v620, 2147483648
        %v625 = vxor.u32 %v622, 2147483648
        %v626 = vmul.f32 %v624, 1.442695
        %v627 = vpow.pop %v626
        %v628 = vmul.f32 %v625, 1.442695
        %v629 = vpow.pop %v628
        %v630 = vadd.f32 %v627, 1.0
        %v631 = vadd.f32 %v629, 1.0
        %v632 = vrcp.pop %v630
        %v633 = vmul.f32 %v630, %v632
        %v634 = vsub.f32 1.0, %v633
        %v635 = vmul.f32 %v632, %v634
        %v636 = vadd.f32 %v632, %v635
        %vm637 = vweird.f32 %v630
        %vm638 = vweird.f32 %v632
        %vm639 = vmor %vm637, %vm638
        %v640 = vsel %vm639, %v632, %v636
        %v641 = vand.u32 2147483647, %v630
        %vm642 = vcmp.eq.f32.partialorder %v641, 8.507059e+37
        %v643 = vand.u32 %v630, 2147483648
        %v644 = vor.u32 1.1754944e-38, %v643
        %v645 = vsel %vm642, %v644, %v640
        %v646 = vmul.f32 1.0, %v645
        %v647 = vrcp.pop %v631
        %v648 = vmul.f32 %v631, %v647
        %v649 = vsub.f32 1.0, %v648
        %v650 = vmul.f32 %v647, %v649
        %v651 = vadd.f32 %v647, %v650
        %vm652 = vweird.f32 %v631
        %vm653 = vweird.f32 %v647
        %vm654 = vmor %vm652, %vm653
        %v655 = vsel %vm654, %v647, %v651
        %v656 = vand.u32 2147483647, %v631
        %vm657 = vcmp.eq.f32.partialorder %v656, 8.507059e+37
        %v658 = vand.u32 %v631, 2147483648
        %v659 = vor.u32 1.1754944e-38, %v658
        %v660 = vsel %vm657, %v659, %v655
        %v661 = vmul.f32 1.0, %v660
        %v662 = vmul.f32 %v620, %v646
        %v663 = vmul.f32 %v622, %v661
        %v664 = vpack.c.bf16 %v662, %v662
        %v665 = vpack.c.bf16 %v663, %v663
        %668 = vrot.lane.b32.xlu0 %v664, 64
        %v669 = vpop.permute.xlu0 %668
        %670 = vrot.lane.b32.xlu0 %v665, 64
        %v671 = vpop.permute.xlu0 %670
        %vm674 = vcmask 519168
        %675 = vst.msk [vmem:[#allocation7] sm:$0xf] %vm674, %v669
        %676 = vst.msk [vmem:[#allocation7 + $0x4] sm:$0xf] %vm674, %v671
        %v677 = vld [vmem:[%s5] sm:$0xf]
        %v678 = vlaneseq
        %v679 = vshrl.u32 %v678, 7
        %v680 = vadd.s32 %v679, 8
        %v681 = vld [vmem:[%s6] sm:$0x1]
        %v683 = vperm.slane %v681, 0
        %v685 = vadd.f32 %v683, 0.0
        %v686 = vperm.slane %v677, 3
        %v687 = vmul.f32 %v686, %v620
        %v688 = vmul.f32 %v686, %v622
        %v689 = vadd.f32 %v685, %v687
        %v690 = vadd.f32 %v685, %v688
        %vm691 = vcmp.ge.s32.totalorder %v679, 1
        %vm692 = vcmp.ge.s32.totalorder %v680, 1
        %v693 = vrot.slane %v620, 7
        %v694 = vrot.slane %v622, 7
        %vm695 = vcmp.lt.s32.totalorder %v679, 1
        %v696 = vsel %vm695, %v693, %v694
        %v697 = vsel %vm695, %v694, %v693
        %v698 = vsel %vm691, 1, 0
        %v699 = vsel %vm692, 1, 0
        %vm700 = vcmp.eq.s32.totalorder %v698, 1
        %vm701 = vcmp.eq.s32.totalorder %v699, 1
        %v702 = vsel %vm700, %v697, 0.0
        %v703 = vsel %vm701, %v696, 0.0
        %v704 = vperm.slane %v677, 2
        %v705 = vmul.f32 %v704, %v702
        %v706 = vmul.f32 %v704, %v703
        %v707 = vadd.f32 %v689, %v705
        %v708 = vadd.f32 %v690, %v706
        %vm709 = vcmp.ge.s32.totalorder %v679, 2
        %vm710 = vcmp.ge.s32.totalorder %v680, 2
        %v711 = vrot.slane %v620, 6
        %v712 = vrot.slane %v622, 6
        %vm713 = vcmp.lt.s32.totalorder %v679, 2
        %v714 = vsel %vm713, %v711, %v712
        %v715 = vsel %vm713, %v712, %v711
        %v716 = vsel %vm709, 1, 0
        %v717 = vsel %vm710, 1, 0
        %vm718 = vcmp.eq.s32.totalorder %v716, 1
        %vm719 = vcmp.eq.s32.totalorder %v717, 1
        %v720 = vsel %vm718, %v715, 0.0
        %v721 = vsel %vm719, %v714, 0.0
        %v722 = vperm.slane %v677, 1
        %v723 = vmul.f32 %v722, %v720
        %v724 = vmul.f32 %v722, %v721
        %v725 = vadd.f32 %v707, %v723
        %v726 = vadd.f32 %v708, %v724
        %vm727 = vcmp.ge.s32.totalorder %v679, 3
        %vm728 = vcmp.ge.s32.totalorder %v680, 3
        %v729 = vrot.slane %v620, 5
        %v730 = vrot.slane %v622, 5
        %vm731 = vcmp.lt.s32.totalorder %v679, 3
        %v732 = vsel %vm731, %v729, %v730
        %v733 = vsel %vm731, %v730, %v729
        %v734 = vsel %vm727, 1, 0
        %v735 = vsel %vm728, 1, 0
        %vm736 = vcmp.eq.s32.totalorder %v734, 1
        %vm737 = vcmp.eq.s32.totalorder %v735, 1
        %v738 = vsel %vm736, %v733, 0.0
        %v739 = vsel %vm737, %v732, 0.0
        %v740 = vperm.slane %v677, 0
        %v741 = vmul.f32 %v740, %v738
        %v742 = vmul.f32 %v740, %v739
        %v743 = vadd.f32 %v725, %v741
        %v744 = vadd.f32 %v726, %v742
        %v745 = vxor.u32 %v743, 2147483648
        %v746 = vxor.u32 %v744, 2147483648
        %v747 = vmul.f32 %v745, 1.442695
        %v748 = vpow.pop %v747
        %v749 = vmul.f32 %v746, 1.442695
        %v750 = vpow.pop %v749
        %v751 = vadd.f32 %v748, 1.0
        %v752 = vadd.f32 %v750, 1.0
        %v753 = vrcp.pop %v751
        %v754 = vmul.f32 %v751, %v753
        %v755 = vsub.f32 1.0, %v754
        %v756 = vmul.f32 %v753, %v755
        %v757 = vadd.f32 %v753, %v756
        %vm758 = vweird.f32 %v751
        %vm759 = vweird.f32 %v753
        %vm760 = vmor %vm758, %vm759
        %v761 = vsel %vm760, %v753, %v757
        %v762 = vand.u32 2147483647, %v751
        %vm763 = vcmp.eq.f32.partialorder %v762, 8.507059e+37
        %v764 = vand.u32 %v751, 2147483648
        %v765 = vor.u32 1.1754944e-38, %v764
        %v766 = vsel %vm763, %v765, %v761
        %v767 = vmul.f32 1.0, %v766
        %v768 = vrcp.pop %v752
        %v769 = vmul.f32 %v752, %v768
        %v770 = vsub.f32 1.0, %v769
        %v771 = vmul.f32 %v768, %v770
        %v772 = vadd.f32 %v768, %v771
        %vm773 = vweird.f32 %v752
        %vm774 = vweird.f32 %v768
        %vm775 = vmor %vm773, %vm774
        %v776 = vsel %vm775, %v768, %v772
        %v777 = vand.u32 2147483647, %v752
        %vm778 = vcmp.eq.f32.partialorder %v777, 8.507059e+37
        %v779 = vand.u32 %v752, 2147483648
        %v780 = vor.u32 1.1754944e-38, %v779
        %v781 = vsel %vm778, %v780, %v776
        %v782 = vmul.f32 1.0, %v781
        %v783 = vmul.f32 %v743, %v767
        %v784 = vmul.f32 %v744, %v782
        %v785 = vld [vmem:[%s10] sm:$0x1]
        %v787 = vperm.slane %v785, 0
        %v789 = vmul.f32 %v783, %v787
        %v790 = vmul.f32 %v784, %v787
        %v791 = vpack.c.bf16 %v789, %v789
        %v792 = vpack.c.bf16 %v790, %v790
        %793 = vst.msk [vmem:[#allocation8] sm:$0xf] %vm674, %v791
        %794 = vst.msk [vmem:[#allocation8 + $0x4] sm:$0xf] %vm674, %v792
        %v795 = vpack.c.bf16 %v784, %v783
        %v796 = vld [vmem:[#allocation15] sm:$0xff]
        %v797 = vld [vmem:[#allocation15 + $0xc] sm:$0xff]
        %v798 = vld [vmem:[#allocation15 + $0x18] sm:$0xff]
        %v799 = vld [vmem:[#allocation15 + $0x24] sm:$0xff]
        %v800 = vld [vmem:[#allocation15 + $0x30] sm:$0xff]
        %v801 = vld [vmem:[#allocation15 + $0x3c] sm:$0xff]
        %v802 = vld [vmem:[#allocation15 + $0x48] sm:$0xff]
        %v803 = vld [vmem:[#allocation15 + $0x54] sm:$0xff]
        %v812 = vunpack.c.l.b16 %v796
        %v813 = vunpack.c.h.b16 %v796
        %v814 = vunpack.c.l.b16 %v797
        %v815 = vunpack.c.h.b16 %v797
        %v816 = vunpack.c.l.b16 %v798
        %v817 = vunpack.c.h.b16 %v798
        %v818 = vunpack.c.l.b16 %v799
        %v819 = vunpack.c.h.b16 %v799
        %v820 = vunpack.c.l.b16 %v800
        %v821 = vunpack.c.h.b16 %v800
        %v822 = vunpack.c.l.b16 %v801
        %v823 = vunpack.c.h.b16 %v801
        %v824 = vunpack.c.l.b16 %v802
        %v825 = vunpack.c.h.b16 %v802
        %v826 = vunpack.c.l.b16 %v803
        %v827 = vunpack.c.h.b16 %v803
        %v828 = vpack.c.b16 %v814, %v812
        %v829 = vpack.c.b16 %v815, %v813
        %v830 = vpack.c.b16 %v818, %v816
        %v831 = vpack.c.b16 %v819, %v817
        %v832 = vpack.c.b16 %v822, %v820
        %v833 = vpack.c.b16 %v823, %v821
        %v834 = vpack.c.b16 %v826, %v824
        %v835 = vpack.c.b16 %v827, %v825
        %vm844 = vcmask 523264
        %v846 = vsel %vm844, %v795, 0
        %848 = vmatpush.bf16.msra.mxu0 0
        %849 = vmatpush.bf16.msra.mxu0 0
        %850 = vmatpush.bf16.msra.mxu0 0
        %851 = vmatpush.bf16.msra.mxu0 0
        %852 = vmatpush.bf16.msra.mxu0 %v834
        %853 = vmatpush.bf16.msra.mxu0 %v832
        %854 = vmatpush.bf16.msra.mxu0 %v830
        %855 = vmatpush.bf16.msra.mxu0 %v828
        %856 = vmatmul.bf16.gmra.mxu0 %v846
        %v857 = vpop.f32.mrf.mxu0
        %v858 = vadd.f32 0.0, %v857
        %v859 = vpop.f32.mrf.mxu0
        %v860 = vadd.f32 0.0, %v859
        %861 = vdwg.mxu0
        %862 = vmatpush.bf16.msra.mxu0 0
        %863 = vmatpush.bf16.msra.mxu0 0
        %864 = vmatpush.bf16.msra.mxu0 0
        %865 = vmatpush.bf16.msra.mxu0 0
        %866 = vmatpush.bf16.msra.mxu0 %v835
        %867 = vmatpush.bf16.msra.mxu0 %v833
        %868 = vmatpush.bf16.msra.mxu0 %v831
        %869 = vmatpush.bf16.msra.mxu0 %v829
        %870 = vmatmul.bf16.gmra.mxu0 %v846
        %v871 = vpop.f32.mrf.mxu0
        %v872 = vadd.f32 0.0, %v871
        %v873 = vpop.f32.mrf.mxu0
        %v874 = vadd.f32 0.0, %v873
        %875 = vdwg.mxu0
        %v876 = vld [vmem:[%s8] sm:$0x1]
        %v878 = vperm.slane %v876, 0
        %v880 = vadd.f32 %v858, %v878
        %v881 = vadd.f32 %v860, %v878
        %vm882 = vcmp.gt.f32.partialorder %v880, 20.0
        %vm883 = vcmp.gt.f32.partialorder %v881, 20.0
        %v884 = vmul.f32 %v880, 1.442695
        %v885 = vpow.pop %v884
        %v886 = vmul.f32 %v881, 1.442695
        %v887 = vpow.pop %v886
        %v888 = vadd.f32 %v885, 1.0
        %v889 = vlog2.pop %v888
        %v890 = vmul.f32 %v889, 0.6931472
        %v891 = vmul.f32 -0.5, %v885
        %v892 = vadd.f32 %v891, 1.0
        %v893 = vmul.f32 %v892, %v885
        %v894 = vand.u32 2147483647, %v885
        %vm895 = vcmp.lt.f32.partialorder %v894, 0.0004427343
        %v896 = vsel %vm895, %v893, %v890
        %v897 = vadd.f32 %v887, 1.0
        %v898 = vlog2.pop %v897
        %v899 = vmul.f32 %v898, 0.6931472
        %v900 = vmul.f32 -0.5, %v887
        %v901 = vadd.f32 %v900, 1.0
        %v902 = vmul.f32 %v901, %v887
        %v903 = vand.u32 2147483647, %v887
        %vm904 = vcmp.lt.f32.partialorder %v903, 0.0004427343
        %v905 = vsel %vm904, %v902, %v899
        %v906 = vsel %vm882, %v880, %v896
        %v907 = vsel %vm883, %v881, %v905
        %908 = vst.msk [vmem:[#allocation2] sm:$0xff] %vm844, %v906
        %909 = vst.msk [vmem:[#allocation2 + $0x8] sm:$0xff] %vm844, %v907
        %v910 = vmul.f32 %v906, %v783
        %v911 = vmul.f32 %v907, %v784
        %912 = vst.msk [vmem:[#allocation3] sm:$0xff] %vm844, %v910
        %913 = vst.msk [vmem:[#allocation3 + $0x8] sm:$0xff] %vm844, %v911
        %915 = vrot.lane.b32.xlu0 %v858, 64
        %v916 = vpop.permute.xlu0 %915
        %918 = vxpose.xlu0.b32.start [1/16] %v916, 128
        %919 = vxpose.xlu0.b32.cont [2/16] 0.0, 128
        %920 = vxpose.xlu0.b32.cont [3/16] 0.0, 128
        %921 = vxpose.xlu0.b32.cont [4/16] 0.0, 128
        %922 = vxpose.xlu0.b32.cont [5/16] 0.0, 128
        %923 = vxpose.xlu0.b32.cont [6/16] 0.0, 128
        %924 = vxpose.xlu0.b32.cont [7/16] 0.0, 128
        %925 = vxpose.xlu0.b32.cont [8/16] 0.0, 128
        %926 = vxpose.xlu0.b32.cont [9/16] 0.0, 128
        %927 = vxpose.xlu0.b32.cont [10/16] 0.0, 128
        %928 = vxpose.xlu0.b32.cont [11/16] 0.0, 128
        %929 = vxpose.xlu0.b32.cont [12/16] 0.0, 128
        %930 = vxpose.xlu0.b32.cont [13/16] 0.0, 128
        %931 = vxpose.xlu0.b32.cont [14/16] 0.0, 128
        %932 = vxpose.xlu0.b32.cont [15/16] 0.0, 128
        %933 = vxpose.xlu0.b32.end [16/16] 0.0, 128
        %v934 = vpop.trf.xlu0
        %v935 = vpop.trf.xlu0
        %v936 = vpop.trf.xlu0
        %v937 = vpop.trf.xlu0
        %v938 = vpop.trf.xlu0
        %v939 = vpop.trf.xlu0
        %v940 = vpop.trf.xlu0
        %v941 = vpop.trf.xlu0
        %v942 = vpop.trf.xlu0
        %v943 = vpop.trf.xlu0
        %v944 = vpop.trf.xlu0
        %v945 = vpop.trf.xlu0
        %v946 = vpop.trf.xlu0
        %v947 = vpop.trf.xlu0
        %v948 = vpop.trf.xlu0
        %v949 = vpop.trf.xlu0
        %vm950 = vcmask 64512
        %951 = vst.msk [vmem:[#allocation4] sm:$0xff] %vm950, %v934
        %952 = vst.msk [vmem:[#allocation4 + $0x8] sm:$0xff] %vm950, %v935
        %954 = vrot.lane.b32.xlu0 %v872, 64
        %v955 = vpop.permute.xlu0 %954
        %957 = vxpose.xlu0.b32.start [1/16] %v955, 128
        %958 = vxpose.xlu0.b32.cont [2/16] 0.0, 128
        %959 = vxpose.xlu0.b32.cont [3/16] 0.0, 128
        %960 = vxpose.xlu0.b32.cont [4/16] 0.0, 128
        %961 = vxpose.xlu0.b32.cont [5/16] 0.0, 128
        %962 = vxpose.xlu0.b32.cont [6/16] 0.0, 128
        %963 = vxpose.xlu0.b32.cont [7/16] 0.0, 128
        %964 = vxpose.xlu0.b32.cont [8/16] 0.0, 128
        %965 = vxpose.xlu0.b32.cont [9/16] 0.0, 128
        %966 = vxpose.xlu0.b32.cont [10/16] 0.0, 128
        %967 = vxpose.xlu0.b32.cont [11/16] 0.0, 128
        %968 = vxpose.xlu0.b32.cont [12/16] 0.0, 128
        %969 = vxpose.xlu0.b32.cont [13/16] 0.0, 128
        %970 = vxpose.xlu0.b32.cont [14/16] 0.0, 128
        %971 = vxpose.xlu0.b32.cont [15/16] 0.0, 128
        %972 = vxpose.xlu0.b32.end [16/16] 0.0, 128
        %v973 = vpop.trf.xlu0
        %v974 = vpop.trf.xlu0
        %v975 = vpop.trf.xlu0
        %v976 = vpop.trf.xlu0
        %v977 = vpop.trf.xlu0
        %v978 = vpop.trf.xlu0
        %v979 = vpop.trf.xlu0
        %v980 = vpop.trf.xlu0
        %v981 = vpop.trf.xlu0
        %v982 = vpop.trf.xlu0
        %v983 = vpop.trf.xlu0
        %v984 = vpop.trf.xlu0
        %v985 = vpop.trf.xlu0
        %v986 = vpop.trf.xlu0
        %v987 = vpop.trf.xlu0
        %v988 = vpop.trf.xlu0
        %989 = vst.msk [vmem:[#allocation5] sm:$0xff] %vm950, %v973
        %990 = vst.msk [vmem:[#allocation5 + $0x8] sm:$0xff] %vm950, %v974
        %992 = vrot.lane.b32.xlu0 %v860, 64
        %v993 = vpop.permute.xlu0 %992
        %995 = vxpose.xlu0.b32.start [1/16] %v993, 128
        %996 = vxpose.xlu0.b32.cont [2/16] 0.0, 128
        %997 = vxpose.xlu0.b32.cont [3/16] 0.0, 128
        %998 = vxpose.xlu0.b32.cont [4/16] 0.0, 128
        %999 = vxpose.xlu0.b32.cont [5/16] 0.0, 128
        %1000 = vxpose.xlu0.b32.cont [6/16] 0.0, 128
        %1001 = vxpose.xlu0.b32.cont [7/16] 0.0, 128
        %1002 = vxpose.xlu0.b32.cont [8/16] 0.0, 128
        %1003 = vxpose.xlu0.b32.cont [9/16] 0.0, 128
        %1004 = vxpose.xlu0.b32.cont [10/16] 0.0, 128
        %1005 = vxpose.xlu0.b32.cont [11/16] 0.0, 128
        %1006 = vxpose.xlu0.b32.cont [12/16] 0.0, 128
        %1007 = vxpose.xlu0.b32.cont [13/16] 0.0, 128
        %1008 = vxpose.xlu0.b32.cont [14/16] 0.0, 128
        %1009 = vxpose.xlu0.b32.cont [15/16] 0.0, 128
        %1010 = vxpose.xlu0.b32.end [16/16] 0.0, 128
        %v1011 = vpop.trf.xlu0
        %v1012 = vpop.trf.xlu0
        %v1013 = vpop.trf.xlu0
        %v1014 = vpop.trf.xlu0
        %v1015 = vpop.trf.xlu0
        %v1016 = vpop.trf.xlu0
        %v1017 = vpop.trf.xlu0
        %v1018 = vpop.trf.xlu0
        %v1019 = vpop.trf.xlu0
        %v1020 = vpop.trf.xlu0
        %v1021 = vpop.trf.xlu0
        %v1022 = vpop.trf.xlu0
        %v1023 = vpop.trf.xlu0
        %v1024 = vpop.trf.xlu0
        %v1025 = vpop.trf.xlu0
        %v1026 = vpop.trf.xlu0
        %s1027 = scalar_lea.vmem [#allocation4], 16
        %1028 = vst.msk [vmem:[%s1027] sm:$0xff] %vm950, %v1011
        %1029 = vst.msk [vmem:[%s1027 + $0x8] sm:$0xff] %vm950, %v1012
        %1031 = vrot.lane.b32.xlu0 %v874, 64
        %v1032 = vpop.permute.xlu0 %1031
        %1034 = vxpose.xlu0.b32.start [1/16] %v1032, 128
        %1035 = vxpose.xlu0.b32.cont [2/16] 0.0, 128
        %1036 = vxpose.xlu0.b32.cont [3/16] 0.0, 128
        %1037 = vxpose.xlu0.b32.cont [4/16] 0.0, 128
        %1038 = vxpose.xlu0.b32.cont [5/16] 0.0, 128
        %1039 = vxpose.xlu0.b32.cont [6/16] 0.0, 128
        %1040 = vxpose.xlu0.b32.cont [7/16] 0.0, 128
        %1041 = vxpose.xlu0.b32.cont [8/16] 0.0, 128
        %1042 = vxpose.xlu0.b32.cont [9/16] 0.0, 128
        %1043 = vxpose.xlu0.b32.cont [10/16] 0.0, 128
        %1044 = vxpose.xlu0.b32.cont [11/16] 0.0, 128
        %1045 = vxpose.xlu0.b32.cont [12/16] 0.0, 128
        %1046 = vxpose.xlu0.b32.cont [13/16] 0.0, 128
        %1047 = vxpose.xlu0.b32.cont [14/16] 0.0, 128
        %1048 = vxpose.xlu0.b32.cont [15/16] 0.0, 128
        %1049 = vxpose.xlu0.b32.end [16/16] 0.0, 128
        %v1050 = vpop.trf.xlu0
        %v1051 = vpop.trf.xlu0
        %v1052 = vpop.trf.xlu0
        %v1053 = vpop.trf.xlu0
        %v1054 = vpop.trf.xlu0
        %v1055 = vpop.trf.xlu0
        %v1056 = vpop.trf.xlu0
        %v1057 = vpop.trf.xlu0
        %v1058 = vpop.trf.xlu0
        %v1059 = vpop.trf.xlu0
        %v1060 = vpop.trf.xlu0
        %v1061 = vpop.trf.xlu0
        %v1062 = vpop.trf.xlu0
        %v1063 = vpop.trf.xlu0
        %v1064 = vpop.trf.xlu0
        %v1065 = vpop.trf.xlu0
        %s1066 = scalar_lea.vmem [#allocation5], 16
        %1067 = vst.msk [vmem:[%s1066] sm:$0xff] %vm950, %v1050
        %1068 = vst.msk [vmem:[%s1066 + $0x8] sm:$0xff] %vm950, %v1051
        %v1069 = vld [vmem:[#allocation17] sm:$0xff]
        %v1070 = vld [vmem:[#allocation17 + $0x8] sm:$0xff]
        loop: start=0, step=1, limit=2
        $region89: #{tpu_custom_call.1} parent=67 // loop_pre_header
          _
        $region90: #{tpu_custom_call.1} parent=67 // loop_header
          %s1072 = sphi 0, %s1076
          %p1073 = scmp.ge.s32.totalorder %s1072, 2
          %v1077 = vphi 0.0, %v1402
          %v1078 = vphi 0.0, %v1403
        $region91: #{tpu_custom_call.1} parent=67 // loop_header_branch
          %1075 = sbr.rel (%p1073) target = $region95
        $region92: #{tpu_custom_call.1} parent=67 // loop_body
          %s1079 = smul.u32 %s1072, 8
          %s1080 = scalar_lea.vmem [#allocation2], %s1079
          %v1081 = vld [vmem:[%s1080] sm:$0xff]
          %s1082 = scalar_lea.vmem [#allocation3], %s1079
          %v1083 = vld [vmem:[%s1082] sm:$0xff]
          %s1084 = smul.u32 %s1072, 16
          %s1085 = scalar_lea.vmem [#allocation4], %s1084
          %v1086 = vld [vmem:[%s1085] sm:$0xff]
          %v1087 = vld [vmem:[%s1085 + $0x8] sm:$0xff]
          %s1088 = scalar_lea.vmem [#allocation5], %s1084
          %v1089 = vld [vmem:[%s1088] sm:$0xff]
          %v1090 = vld [vmem:[%s1088 + $0x8] sm:$0xff]
          %v1091 = vperm.slane %v1081, 0
          %v1092 = vmul.f32 %v1091, %v1069
          %v1093 = vmul.f32 %v1091, %v1070
          %v1094 = vmul.f32 %v1092, 1.442695
          %v1095 = vpow.pop %v1094
          %v1096 = vmul.f32 %v1093, 1.442695
          %v1097 = vpow.pop %v1096
          %v1098 = vperm.slane %v1081, 1
          %v1099 = vmul.f32 %v1098, %v1069
          %v1100 = vmul.f32 %v1098, %v1070
          %v1101 = vmul.f32 %v1099, 1.442695
          %v1102 = vpow.pop %v1101
          %v1103 = vmul.f32 %v1100, 1.442695
          %v1104 = vpow.pop %v1103
          %v1105 = vperm.slane %v1081, 2
          %v1106 = vmul.f32 %v1105, %v1069
          %v1107 = vmul.f32 %v1105, %v1070
          %v1108 = vmul.f32 %v1106, 1.442695
          %v1109 = vpow.pop %v1108
          %v1110 = vmul.f32 %v1107, 1.442695
          %v1111 = vpow.pop %v1110
          %v1112 = vperm.slane %v1081, 3
          %v1113 = vmul.f32 %v1112, %v1069
          %v1114 = vmul.f32 %v1112, %v1070
          %v1115 = vmul.f32 %v1113, 1.442695
          %v1116 = vpow.pop %v1115
          %v1117 = vmul.f32 %v1114, 1.442695
          %v1118 = vpow.pop %v1117
          %v1119 = vperm.slane %v1081, 4
          %v1120 = vmul.f32 %v1119, %v1069
          %v1121 = vmul.f32 %v1119, %v1070
          %v1122 = vmul.f32 %v1120, 1.442695
          %v1123 = vpow.pop %v1122
          %v1124 = vmul.f32 %v1121, 1.442695
          %v1125 = vpow.pop %v1124
          %v1126 = vperm.slane %v1081, 5
          %v1127 = vmul.f32 %v1126, %v1069
          %v1128 = vmul.f32 %v1126, %v1070
          %v1129 = vmul.f32 %v1127, 1.442695
          %v1130 = vpow.pop %v1129
          %v1131 = vmul.f32 %v1128, 1.442695
          %v1132 = vpow.pop %v1131
          %v1133 = vperm.slane %v1081, 6
          %v1134 = vmul.f32 %v1133, %v1069
          %v1135 = vmul.f32 %v1133, %v1070
          %v1136 = vmul.f32 %v1134, 1.442695
          %v1137 = vpow.pop %v1136
          %v1138 = vmul.f32 %v1135, 1.442695
          %v1139 = vpow.pop %v1138
          %v1140 = vperm.slane %v1081, 7
          %v1141 = vmul.f32 %v1140, %v1069
          %v1142 = vmul.f32 %v1140, %v1070
          %v1143 = vmul.f32 %v1141, 1.442695
          %v1144 = vpow.pop %v1143
          %v1145 = vmul.f32 %v1142, 1.442695
          %v1146 = vpow.pop %v1145
          %1148 = vset.pattern.permute.xlu0 0
          %1149 = vperm.xlu0 %1148, %v1086
          %v1150 = vpop.permute.xlu0 %1149
          %1153 = vset.pattern.permute.xlu0 0
          %1154 = vperm.xlu0 %1153, %v1087
          %v1155 = vpop.permute.xlu0 %1154
          %v1157 = vperm.slane %v1083, 0
          %v1158 = vmul.f32 %v1150, %v1157
          %v1159 = vmul.f32 %v1155, %v1157
          %1160 = vset.pattern.permute.xlu0 1
          %1161 = vperm.xlu0 %1160, %v1086
          %v1162 = vpop.permute.xlu0 %1161
          %1164 = vset.pattern.permute.xlu0 1
          %1165 = vperm.xlu0 %1164, %v1087
          %v1166 = vpop.permute.xlu0 %1165
          %v1168 = vperm.slane %v1083, 1
          %v1169 = vmul.f32 %v1162, %v1168
          %v1170 = vmul.f32 %v1166, %v1168
          %1171 = vset.pattern.permute.xlu0 2
          %1172 = vperm.xlu0 %1171, %v1086
          %v1173 = vpop.permute.xlu0 %1172
          %1175 = vset.pattern.permute.xlu0 2
          %1176 = vperm.xlu0 %1175, %v1087
          %v1177 = vpop.permute.xlu0 %1176
          %v1179 = vperm.slane %v1083, 2
          %v1180 = vmul.f32 %v1173, %v1179
          %v1181 = vmul.f32 %v1177, %v1179
          %1182 = vset.pattern.permute.xlu0 3
          %1183 = vperm.xlu0 %1182, %v1086
          %v1184 = vpop.permute.xlu0 %1183
          %1186 = vset.pattern.permute.xlu0 3
          %1187 = vperm.xlu0 %1186, %v1087
          %v1188 = vpop.permute.xlu0 %1187
          %v1190 = vperm.slane %v1083, 3
          %v1191 = vmul.f32 %v1184, %v1190
          %v1192 = vmul.f32 %v1188, %v1190
          %1193 = vset.pattern.permute.xlu0 4
          %1194 = vperm.xlu0 %1193, %v1086
          %v1195 = vpop.permute.xlu0 %1194
          %1197 = vset.pattern.permute.xlu0 4
          %1198 = vperm.xlu0 %1197, %v1087
          %v1199 = vpop.permute.xlu0 %1198
          %v1201 = vperm.slane %v1083, 4
          %v1202 = vmul.f32 %v1195, %v1201
          %v1203 = vmul.f32 %v1199, %v1201
          %1204 = vset.pattern.permute.xlu0 5
          %1205 = vperm.xlu0 %1204, %v1086
          %v1206 = vpop.permute.xlu0 %1205
          %1208 = vset.pattern.permute.xlu0 5
          %1209 = vperm.xlu0 %1208, %v1087
          %v1210 = vpop.permute.xlu0 %1209
          %v1212 = vperm.slane %v1083, 5
          %v1213 = vmul.f32 %v1206, %v1212
          %v1214 = vmul.f32 %v1210, %v1212
          %1215 = vset.pattern.permute.xlu0 6
          %1216 = vperm.xlu0 %1215, %v1086
          %v1217 = vpop.permute.xlu0 %1216
          %1219 = vset.pattern.permute.xlu0 6
          %1220 = vperm.xlu0 %1219, %v1087
          %v1221 = vpop.permute.xlu0 %1220
          %v1223 = vperm.slane %v1083, 6
          %v1224 = vmul.f32 %v1217, %v1223
          %v1225 = vmul.f32 %v1221, %v1223
          %1226 = vset.pattern.permute.xlu0 7
          %1227 = vperm.xlu0 %1226, %v1086
          %v1228 = vpop.permute.xlu0 %1227
          %1230 = vset.pattern.permute.xlu0 7
          %1231 = vperm.xlu0 %1230, %v1087
          %v1232 = vpop.permute.xlu0 %1231
          %v1234 = vperm.slane %v1083, 7
          %v1235 = vmul.f32 %v1228, %v1234
          %v1236 = vmul.f32 %v1232, %v1234
          %v1237 = vmul.f32 %v1095, %v1077
          %v1238 = vmul.f32 %v1097, %v1078
          %v1239 = vadd.f32 %v1237, %v1158
          %v1240 = vadd.f32 %v1238, %v1159
          %1242 = vset.pattern.permute.xlu0 0
          %1243 = vperm.xlu0 %1242, %v1089
          %v1244 = vpop.permute.xlu0 %1243
          %1247 = vset.pattern.permute.xlu0 0
          %1248 = vperm.xlu0 %1247, %v1090
          %v1249 = vpop.permute.xlu0 %1248
          %v1251 = vmul.f32 %v1239, %v1244
          %v1252 = vmul.f32 %v1240, %v1249
          %v1253 = vsel %vm844, %v1251, 0.0
          %v1254 = vsel %vm844, %v1252, 0.0
          %v1255 = vadd.f32 %v1253, %v1254
          %v1256 = vrot.slane %v1255, 4
          %v1257 = vadd.f32 %v1255, %v1256
          %v1258 = vrot.slane %v1257, 2
          %v1259 = vadd.f32 %v1257, %v1258
          %v1260 = vrot.slane %v1259, 1
          %v1261 = vadd.f32 %v1259, %v1260
          %v1262 = vmul.f32 %v1102, %v1239
          %v1263 = vmul.f32 %v1104, %v1240
          %v1264 = vadd.f32 %v1262, %v1169
          %v1265 = vadd.f32 %v1263, %v1170
          %1266 = vset.pattern.permute.xlu0 1
          %1267 = vperm.xlu0 %1266, %v1089
          %v1268 = vpop.permute.xlu0 %1267
          %1270 = vset.pattern.permute.xlu0 1
          %1271 = vperm.xlu0 %1270, %v1090
          %v1272 = vpop.permute.xlu0 %1271
          %v1274 = vmul.f32 %v1264, %v1268
          %v1275 = vmul.f32 %v1265, %v1272
          %v1276 = vsel %vm844, %v1274, 0.0
          %v1277 = vsel %vm844, %v1275, 0.0
          %v1278 = vadd.f32 %v1276, %v1277
          %v1279 = vrot.slane %v1278, 4
          %v1280 = vadd.f32 %v1278, %v1279
          %v1281 = vrot.slane %v1280, 2
          %v1282 = vadd.f32 %v1280, %v1281
          %v1283 = vrot.slane %v1282, 1
          %v1284 = vadd.f32 %v1282, %v1283
          %v1285 = vmul.f32 %v1109, %v1264
          %v1286 = vmul.f32 %v1111, %v1265
          %v1287 = vadd.f32 %v1285, %v1180
          %v1288 = vadd.f32 %v1286, %v1181
          %1289 = vset.pattern.permute.xlu0 2
          %1290 = vperm.xlu0 %1289, %v1089
          %v1291 = vpop.permute.xlu0 %1290
          %1293 = vset.pattern.permute.xlu0 2
          %1294 = vperm.xlu0 %1293, %v1090
          %v1295 = vpop.permute.xlu0 %1294
          %v1297 = vmul.f32 %v1287, %v1291
          %v1298 = vmul.f32 %v1288, %v1295
          %v1299 = vsel %vm844, %v1297, 0.0
          %v1300 = vsel %vm844, %v1298, 0.0
          %v1301 = vadd.f32 %v1299, %v1300
          %v1302 = vrot.slane %v1301, 4
          %v1303 = vadd.f32 %v1301, %v1302
          %v1304 = vrot.slane %v1303, 2
          %v1305 = vadd.f32 %v1303, %v1304
          %v1306 = vrot.slane %v1305, 1
          %v1307 = vadd.f32 %v1305, %v1306
          %v1308 = vmul.f32 %v1116, %v1287
          %v1309 = vmul.f32 %v1118, %v1288
          %v1310 = vadd.f32 %v1308, %v1191
          %v1311 = vadd.f32 %v1309, %v1192
          %1312 = vset.pattern.permute.xlu0 3
          %1313 = vperm.xlu0 %1312, %v1089
          %v1314 = vpop.permute.xlu0 %1313
          %1316 = vset.pattern.permute.xlu0 3
          %1317 = vperm.xlu0 %1316, %v1090
          %v1318 = vpop.permute.xlu0 %1317
          %v1320 = vmul.f32 %v1310, %v1314
          %v1321 = vmul.f32 %v1311, %v1318
          %v1322 = vsel %vm844, %v1320, 0.0
          %v1323 = vsel %vm844, %v1321, 0.0
          %v1324 = vadd.f32 %v1322, %v1323
          %v1325 = vrot.slane %v1324, 4
          %v1326 = vadd.f32 %v1324, %v1325
          %v1327 = vrot.slane %v1326, 2
          %v1328 = vadd.f32 %v1326, %v1327
          %v1329 = vrot.slane %v1328, 1
          %v1330 = vadd.f32 %v1328, %v1329
          %v1331 = vmul.f32 %v1123, %v1310
          %v1332 = vmul.f32 %v1125, %v1311
          %v1333 = vadd.f32 %v1331, %v1202
          %v1334 = vadd.f32 %v1332, %v1203
          %1335 = vset.pattern.permute.xlu0 4
          %1336 = vperm.xlu0 %1335, %v1089
          %v1337 = vpop.permute.xlu0 %1336
          %1339 = vset.pattern.permute.xlu0 4
          %1340 = vperm.xlu0 %1339, %v1090
          %v1341 = vpop.permute.xlu0 %1340
          %v1343 = vmul.f32 %v1333, %v1337
          %v1344 = vmul.f32 %v1334, %v1341
          %v1345 = vsel %vm844, %v1343, 0.0
          %v1346 = vsel %vm844, %v1344, 0.0
          %v1347 = vadd.f32 %v1345, %v1346
          %v1348 = vrot.slane %v1347, 4
          %v1349 = vadd.f32 %v1347, %v1348
          %v1350 = vrot.slane %v1349, 2
          %v1351 = vadd.f32 %v1349, %v1350
          %v1352 = vrot.slane %v1351, 1
          %v1353 = vadd.f32 %v1351, %v1352
          %v1354 = vmul.f32 %v1130, %v1333
          %v1355 = vmul.f32 %v1132, %v1334
          %v1356 = vadd.f32 %v1354, %v1213
          %v1357 = vadd.f32 %v1355, %v1214
          %1358 = vset.pattern.permute.xlu0 5
          %1359 = vperm.xlu0 %1358, %v1089
          %v1360 = vpop.permute.xlu0 %1359
          %1362 = vset.pattern.permute.xlu0 5
          %1363 = vperm.xlu0 %1362, %v1090
          %v1364 = vpop.permute.xlu0 %1363
          %v1366 = vmul.f32 %v1356, %v1360
          %v1367 = vmul.f32 %v1357, %v1364
          %v1368 = vsel %vm844, %v1366, 0.0
          %v1369 = vsel %vm844, %v1367, 0.0
          %v1370 = vadd.f32 %v1368, %v1369
          %v1371 = vrot.slane %v1370, 4
          %v1372 = vadd.f32 %v1370, %v1371
          %v1373 = vrot.slane %v1372, 2
          %v1374 = vadd.f32 %v1372, %v1373
          %v1375 = vrot.slane %v1374, 1
          %v1376 = vadd.f32 %v1374, %v1375
          %v1377 = vmul.f32 %v1137, %v1356
          %v1378 = vmul.f32 %v1139, %v1357
          %v1379 = vadd.f32 %v1377, %v1224
          %v1380 = vadd.f32 %v1378, %v1225
          %1381 = vset.pattern.permute.xlu0 6
          %1382 = vperm.xlu0 %1381, %v1089
          %v1383 = vpop.permute.xlu0 %1382
          %1385 = vset.pattern.permute.xlu0 6
          %1386 = vperm.xlu0 %1385, %v1090
          %v1387 = vpop.permute.xlu0 %1386
          %v1389 = vmul.f32 %v1379, %v1383
          %v1390 = vmul.f32 %v1380, %v1387
          %v1391 = vsel %vm844, %v1389, 0.0
          %v1392 = vsel %vm844, %v1390, 0.0
          %v1393 = vadd.f32 %v1391, %v1392
          %v1394 = vrot.slane %v1393, 4
          %v1395 = vadd.f32 %v1393, %v1394
          %v1396 = vrot.slane %v1395, 2
          %v1397 = vadd.f32 %v1395, %v1396
          %v1398 = vrot.slane %v1397, 1
          %v1399 = vadd.f32 %v1397, %v1398
          %v1400 = vmul.f32 %v1144, %v1379
          %v1401 = vmul.f32 %v1146, %v1380
          %v1402 = vadd.f32 %v1400, %v1235
          %v1403 = vadd.f32 %v1401, %v1236
          %1404 = vset.pattern.permute.xlu0 7
          %1405 = vperm.xlu0 %1404, %v1089
          %v1406 = vpop.permute.xlu0 %1405
          %1408 = vset.pattern.permute.xlu0 7
          %1409 = vperm.xlu0 %1408, %v1090
          %v1410 = vpop.permute.xlu0 %1409
          %v1412 = vmul.f32 %v1402, %v1406
          %v1413 = vmul.f32 %v1403, %v1410
          %v1414 = vsel %vm844, %v1412, 0.0
          %v1415 = vsel %vm844, %v1413, 0.0
          %v1416 = vadd.f32 %v1414, %v1415
          %v1417 = vrot.slane %v1416, 4
          %v1418 = vadd.f32 %v1416, %v1417
          %v1419 = vrot.slane %v1418, 2
          %v1420 = vadd.f32 %v1418, %v1419
          %v1421 = vrot.slane %v1420, 1
          %v1422 = vadd.f32 %v1420, %v1421
          %vm1423 = vcmask 1040384
          %v1424 = vsel %vm1423, %v1261, %v1284
          %vm1425 = vcmask 1041408
          %v1426 = vsel %vm1425, %v1424, %v1307
          %vm1427 = vcmask 1042432
          %v1428 = vsel %vm1427, %v1426, %v1330
          %vm1429 = vcmask 1043456
          %v1430 = vsel %vm1429, %v1428, %v1353
          %vm1431 = vcmask 1044480
          %v1432 = vsel %vm1431, %v1430, %v1376
          %vm1433 = vcmask 1045504
          %v1434 = vsel %vm1433, %v1432, %v1399
          %vm1435 = vcmask 1046528
          %v1436 = vsel %vm1435, %v1434, %v1422
          %s1437 = scalar_lea.vmem [#allocation6], %s1079
          %1438 = vst.msk [vmem:[%s1437] sm:$0xff] %vm844, %v1436
        $region93: #{tpu_custom_call.1} parent=67 // loop_footer
          %s1076 = sadd.s32 1, %s1072
        $region94: #{tpu_custom_call.1} parent=67 // loop_footer_branch
          %1071 = sbr.rel target = $region90
        $region95: #{tpu_custom_call.1} parent=67 // loop_exit
          _
        %v1439 = vld [vmem:[#allocation6] sm:$0xff]
        %v1440 = vld [vmem:[#allocation6 + $0x8] sm:$0xff]
        %v1441 = vld [vmem:[#allocation8] sm:$0xf]
        %v1442 = vld [vmem:[#allocation8 + $0x4] sm:$0xf]
        %v1443 = vunpack.c.l.bf16 %v1441
        %v1444 = vunpack.c.l.bf16 %v1442
        %v1445 = vadd.f32 %v1439, %v1443
        %v1446 = vadd.f32 %v1440, %v1444
        %v1447 = vld [vmem:[#allocation7] sm:$0xf]
        %v1448 = vld [vmem:[#allocation7 + $0x4] sm:$0xf]
        %v1449 = vunpack.c.l.bf16 %v1447
        %v1450 = vunpack.c.l.bf16 %v1448
        %v1451 = vmul.f32 %v1445, %v1449
        %v1452 = vmul.f32 %v1446, %v1450
        %v1453 = vpack.c.bf16 %v1452, %v1451
        %v1454 = vld [vmem:[%s11] sm:$0xf]
        %v1455 = vld [vmem:[%s11 + $0x4] sm:$0xf]
        %v1456 = vld [vmem:[%s11 + $0x8] sm:$0xf]
        %v1457 = vld [vmem:[%s11 + $0xc] sm:$0xf]
        %v1458 = vld [vmem:[%s11 + $0x10] sm:$0xf]
        %v1459 = vld [vmem:[%s11 + $0x14] sm:$0xf]
        %v1460 = vld [vmem:[%s11 + $0x18] sm:$0xf]
        %v1461 = vld [vmem:[%s11 + $0x1c] sm:$0xf]
        %v1470 = vunpack.c.l.b16 %v1454
        %v1471 = vunpack.c.l.b16 %v1455
        %v1472 = vunpack.c.l.b16 %v1456
        %v1473 = vunpack.c.l.b16 %v1457
        %v1474 = vunpack.c.l.b16 %v1458
        %v1475 = vunpack.c.l.b16 %v1459
        %v1476 = vunpack.c.l.b16 %v1460
        %v1477 = vunpack.c.l.b16 %v1461
        %v1478 = vpack.c.b16 %v1471, %v1470
        %v1479 = vpack.c.b16 %v1473, %v1472
        %v1480 = vpack.c.b16 %v1475, %v1474
        %v1481 = vpack.c.b16 %v1477, %v1476
        %v1487 = vsel %vm844, %v1453, 0
        %1489 = vmatpush.bf16.msra.mxu0 0
        %1490 = vmatpush.bf16.msra.mxu0 0
        %1491 = vmatpush.bf16.msra.mxu0 0
        %1492 = vmatpush.bf16.msra.mxu0 0
        %1493 = vmatpush.bf16.msra.mxu0 %v1481
        %1494 = vmatpush.bf16.msra.mxu0 %v1480
        %1495 = vmatpush.bf16.msra.mxu0 %v1479
        %1496 = vmatpush.bf16.msra.mxu0 %v1478
        %1497 = vmatmul.bf16.gmra.mxu0 %v1487
        %v1498 = vpop.f32.mrf.mxu0
        %v1499 = vadd.f32 0.0, %v1498
        %v1500 = vpop.f32.mrf.mxu0
        %v1501 = vadd.f32 0.0, %v1500
        %1502 = vdwg.mxu0
        %v1503 = vld [vmem:[%s508] sm:$0xff]
        %v1504 = vld [vmem:[%s508 + $0x8] sm:$0xff]
        %1507 = vrot.lane.b32.xlu0 %v1499, 64
        %v1508 = vpop.permute.xlu0 %1507
        %1509 = vrot.lane.b32.xlu0 %v1501, 64
        %v1510 = vpop.permute.xlu0 %1509
        %v1513 = vmul.f32 %v586, %v1508
        %v1514 = vmul.f32 %v586, %v1510
        %1517 = vrot.lane.b32.xlu0 %v1513, 64
        %v1518 = vpop.permute.xlu0 %1517
        %1519 = vrot.lane.b32.xlu0 %v1514, 64
        %v1520 = vpop.permute.xlu0 %1519
        %v1523 = vadd.f32 %v1503, %v1518
        %v1524 = vadd.f32 %v1504, %v1520
        %1525 = vst.msk [vmem:[%s503] sm:$0xff] %vm513, %v1523
        %1526 = vst.msk [vmem:[%s503 + $0x8] sm:$0xff] %vm513, %v1524
        %s1527 = sand.u32 %s301, 1
        %s1528 = scalar_lea.sflag [#allocation11], %s1527
        %s1529 = sand.u32 %s301, 1
        %s1530 = smul.addr %s1529, 16
        %s1531 = scalar_lea.vmem [#allocation18], %s1530
        // Predicated region
        $region96: #{tpu_custom_call.1} parent=67 // pred_check
          %p1532 = pneg %p311
        $region97: #{tpu_custom_call.1} parent=67 // pred_check_branch
          %1534 = sbr.rel (%p1532) target = $region99
        $region98: #{tpu_custom_call.1} parent=67 // pred_region
          %1536 = vsyncadd %s1528, 0
          %s1537 = smul.addr %s31, 2
          %s1538 = smul.addr %s1537, 8
          %s1539 = scalar_lea.hbm %s12, %s1538
          %s1540 = sshll.u32 %s1531, 4
          %s1541 = int_to_ptr.vmem [resolvable:$true] %s1540
          %s1542 = sshll.u32 %s1539, 4
          %s1543 = int_to_ptr.hbm [resolvable:$true] %s1542
          %1548 = dma.vmem_to_hbm [thread:$0]  %s1541, 256, %s1543, %s1528, 128, 128, 8
        $region99: #{tpu_custom_call.1} parent=67 // pred_fallthru
          _
      $region68: #{tpu_custom_call.1} parent=5 // pred_fallthru
        _
      %p1549 = scmp.le.s32.totalorder 2, %s26
      // Predicated region
      $region100: #{tpu_custom_call.1} parent=5 // pred_check
        %p1550 = pneg %p1549
      $region101: #{tpu_custom_call.1} parent=5 // pred_check_branch
        %1552 = sbr.rel (%p1550) target = $region103
      $region102: #{tpu_custom_call.1} parent=5 // pred_region
        %s1553 = ssub.s32 %s26, 2
        // Predicated region
        $region104: #{tpu_custom_call.1} parent=102 // pred_check
          %p1554 = pneg %p317
        $region105: #{tpu_custom_call.1} parent=102 // pred_check_branch
          %1556 = sbr.rel (%p1554) target = $region107
        $region106: #{tpu_custom_call.1} parent=102 // pred_region
          %s1557 = sand.u32 %s302, 1
          %s1558 = scalar_lea.sflag [#allocation11], %s1557
          %s1559 = sand.u32 %s302, 1
          %s1560 = smul.addr %s1559, 16
          %s1561 = scalar_lea.vmem [#allocation18], %s1560
          %1563 = dma.done %s1558, 256
        $region107: #{tpu_custom_call.1} parent=102 // pred_fallthru
          _
      $region103: #{tpu_custom_call.1} parent=5 // pred_fallthru
        _
    $region6: #{tpu_custom_call.1} parent=1 // loop_footer
      %s30 = sadd.s32 1, %s26
    $region7: #{tpu_custom_call.1} parent=1 // loop_footer_branch
      %25 = sbr.rel target = $region3
    $region8: #{tpu_custom_call.1} parent=1 // loop_exit
      _
    %1564 = vsyncpa [#allocation10], 1
    %s1565 = scalar_lea.sflag [#allocation10], 1
    %1566 = vsyncpa %s1565, 1
    %1567 = vsyncpa [#allocation13], 1
    %1568 = vsyncpa [#allocation16], 1
    %1569 = vsyncpa [#allocation11], 1
    %s1570 = scalar_lea.sflag [#allocation11], 1
    %1571 = vsyncpa %s1570, 1

</llo_original>
